<compile_context>
chip_gen: v5e
topology: v5e:2x2
jax: 0.10.0
libtpu: 0.0.40
codegen_flags: <defaults>
</compile_context>

<pallas_src>
import math
from functools import partial

import jax
import jax.numpy as jnp
from jax.experimental import pallas as pl
from jax.experimental.pallas import tpu as pltpu


# ----------------------------------------------------------------------------
# Tiling helpers
# ----------------------------------------------------------------------------
def _round_up(x, m):
    return ((x + m - 1) // m) * m


def _pick_tile(dim, target, align):
    """Largest `align`-multiple divisor of `dim` that is <= target.
    Returns `dim` itself when dim <= target (block == full dim is always legal)."""
    if dim <= target:
        return dim
    t = (target // align) * align
    while t >= align:
        if dim % t == 0:
            return t
        t -= align
    return dim  # no aligned divisor: fall back to an untiled (full) dim


def _seq_tile(seq, target):
    """Sequence tile: multiple of 8 dividing seq, else the full sequence."""
    if seq <= target:
        return seq
    t = (target // 8) * 8
    while t >= 8:
        if seq % t == 0:
            return t
        t -= 8
    return seq


# ----------------------------------------------------------------------------
# Kernel 1: tiled fused QKV projection   y = x @ Wqkv + bqkv   (bf16 MXU, f32 acc)
#   x: (M, K) f32, Wqkv: (K, N=3D) bf16, bqkv: (1, N) f32  ->  y: (M, N) bf16
#   grid = (M/tm, N/tn, K/tk); bias fused into the last-k store.
# ----------------------------------------------------------------------------
def _matmul_bias_kernel(x_ref, w_ref, b_ref, o_ref, acc_ref):
    @pl.when(pl.program_id(2) == 0)
    def _():
        acc_ref[...] = jnp.zeros_like(acc_ref)

    # bf16 x bf16 -> f32 accumulation on the MXU (x tile cast in-kernel, cheap VPU op).
    acc_ref[...] += jnp.dot(x_ref[...].astype(w_ref.dtype), w_ref[...],
                            preferred_element_type=jnp.float32)

    @pl.when(pl.program_id(2) == pl.num_programs(2) - 1)
    def _():
        o_ref[...] = (acc_ref[...] + b_ref[...]).astype(o_ref.dtype)


def fused_linear(x2d, w, b, *, tm=256, tn=512, tk=512, out_dtype=jnp.bfloat16):
    """y = x2d @ w + b, tiled (M, N, K) with an f32 VMEM accumulator.

    Working set with the defaults is ~3 MiB, safe on all generations.
    v5e/v6e (128 MiB VMEM): tiles can be raised to (512, 512, 1024) and
    vmem_limit_bytes bumped; v7x (64 MiB): keep <= (256, 512, 512).
    """
    M, K = x2d.shape
    _, N = w.shape

    tm = min(tm, _round_up(M, 8))
    Mp = _round_up(M, tm)
    if Mp != M:
        x2d = jnp.pad(x2d, ((0, Mp - M), (0, 0)))   # ragged M: pad, slice off below
    tn = _pick_tile(N, tn, 128)
    tk = _pick_tile(K, tk, 128)
    grid = (Mp // tm, N // tn, K // tk)

    out = pl.pallas_call(
        _matmul_bias_kernel,
        out_shape=jax.ShapeDtypeStruct((Mp, N), out_dtype),
        grid_spec=pltpu.PrefetchScalarGridSpec(
            num_scalar_prefetch=0,
            grid=grid,
            in_specs=[
                pl.BlockSpec((tm, tk), lambda i, j, k: (i, k)),
                # TODO(synk): on v5e consider pipeline_mode=pl.Buffered(3) here to
                #             keep the weight stream hidden behind the MXU.
                pl.BlockSpec((tk, tn), lambda i, j, k: (k, j)),
                pl.BlockSpec((1, tn), lambda i, j, k: (0, j)),
            ],
            out_specs=pl.BlockSpec((tm, tn), lambda i, j, k: (i, j)),
            scratch_shapes=[pltpu.VMEM((tm, tn), jnp.float32)],
        ),
        compiler_params=pltpu.CompilerParams(
            dimension_semantics=("parallel", "parallel", "arbitrary")),
    )(x2d, w, b)
    return out[:M] if Mp != M else out


# ----------------------------------------------------------------------------
# Kernel 2: flash-tiled multi-head attention + fused output projection.
#   grid (B, q_tiles, kv_tiles); per-head online-softmax accumulators in VMEM;
#   heads handled by a static loop over ref slices; epilogue applies Wp per
#   query tile and writes one lane-dense (tq, D) block.
# ----------------------------------------------------------------------------
def _mha_flash_kernel(qkvq_ref, qkvkv_ref, wp_ref, bp_ref, o_ref,
                      m_scr, l_scr, ctx_scr, *, num_heads, head_dim, dim):
    j = pl.program_id(2)
    H, Dh, D = num_heads, head_dim, dim

    @pl.when(j == 0)
    def _():
        m_scr[...] = jnp.full(m_scr.shape, -jnp.inf, m_scr.dtype)
        l_scr[...] = jnp.zeros_like(l_scr)
        ctx_scr[...] = jnp.zeros_like(ctx_scr)

    # Online-softmax update for this (q-tile, kv-tile). Heads as a static loop
    # reading (t, Dh) slices straight off the refs — no (S, 3D) load + reshape.
    for h in range(H):
        q_h = qkvq_ref[0, :, h * Dh:(h + 1) * Dh]                    # (tq, Dh) bf16
        k_h = qkvkv_ref[0, :, D + h * Dh:D + (h + 1) * Dh]           # (tk, Dh) bf16
        v_h = qkvkv_ref[0, :, 2 * D + h * Dh:2 * D + (h + 1) * Dh]   # (tk, Dh) bf16

        # scores (1/sqrt(Dh) already folded into Wq): (tq, tk) f32
        s = jax.lax.dot_general(q_h, k_h, (((1,), (1,)), ((), ())),
                                preferred_element_type=jnp.float32)

        m_prev = m_scr[h]                                            # (tq, 1) f32
        m_new = jnp.maximum(m_prev, jnp.max(s, axis=-1, keepdims=True))
        alpha = jnp.exp(m_prev - m_new)
        p = jnp.exp(s - m_new)                                       # f32 softmax math
        l_scr[h] = alpha * l_scr[h] + jnp.sum(p, axis=-1, keepdims=True)
        ctx_scr[h] = alpha * ctx_scr[h] + jnp.dot(
            p.astype(v_h.dtype), v_h, preferred_element_type=jnp.float32)
        m_scr[h] = m_new
        # TODO(synk): training-mode attention dropout on `p` not applied (eval path).

    # Epilogue: normalize + fused output projection for this query tile.
    # Wp stays VMEM-resident; single lane-dense (tq, D) store.
    @pl.when(j == pl.num_programs(2) - 1)
    def _():
        tq = o_ref.shape[1]
        acc = jnp.zeros((tq, D), jnp.float32)
        for h in range(H):
            ctx_h = ctx_scr[h] * pl.reciprocal(l_scr[h], approx=True)  # (tq, Dh) f32
            wp_h = wp_ref[h * Dh:(h + 1) * Dh, :]                      # (Dh, D) bf16
            acc = acc + jnp.dot(ctx_h.astype(wp_h.dtype), wp_h,
                                preferred_element_type=jnp.float32)
        o_ref[0] = (acc + bp_ref[...]).astype(o_ref.dtype)


def flash_attention_proj(qkv, wp, bp, num_heads, *, tq=128, tkv=256,
                         out_dtype=jnp.float32):
    B, S, threeD = qkv.shape
    D = threeD // 3
    Dh = D // num_heads
    tq = _seq_tile(S, tq)
    tkv = _seq_tile(S, tkv)
    kernel = partial(_mha_flash_kernel, num_heads=num_heads, head_dim=Dh, dim=D)
    return pl.pallas_call(
        kernel,
        out_shape=jax.ShapeDtypeStruct((B, S, D), out_dtype),
        grid_spec=pltpu.PrefetchScalarGridSpec(
            num_scalar_prefetch=0,
            grid=(B, S // tq, S // tkv),
            in_specs=[
                # q rows of qkv: index map constant across kv steps -> fetched once per (b, i)
                pl.BlockSpec((1, tq, threeD), lambda b, i, j: (b, i, 0)),
                # k/v rows of qkv: streamed along the kv grid axis
                # TODO(synk): this block also carries the unused q columns (1.5x DMA);
                #             emitting separate q / kv activations would remove it.
                pl.BlockSpec((1, tkv, threeD), lambda b, i, j: (b, j, 0)),
                pl.BlockSpec((D, D), lambda b, i, j: (0, 0)),   # Wp resident in VMEM
                pl.BlockSpec((1, D), lambda b, i, j: (0, 0)),   # bp resident
            ],
            out_specs=pl.BlockSpec((1, tq, D), lambda b, i, j: (b, i, 0)),
            scratch_shapes=[
                pltpu.VMEM((num_heads, tq, 1), jnp.float32),    # running max (per head)
                pltpu.VMEM((num_heads, tq, 1), jnp.float32),    # running denom
                pltpu.VMEM((num_heads, tq, Dh), jnp.float32),   # running context
            ],
        ),
        compiler_params=pltpu.CompilerParams(
            dimension_semantics=("parallel", "parallel", "arbitrary")),
    )(qkv, qkv, wp, bp)


# ----------------------------------------------------------------------------
# Parameter prep (one-time, hoisted off the per-call path) + forward pass.
# ----------------------------------------------------------------------------
def prepare_params(params, num_heads, compute_dtype=jnp.bfloat16):
    """Fold 1/sqrt(Dh) into Wq/bq, fuse [Wq|Wk|Wv] + biases, pre-cast weights to bf16."""
    D = params["wq"].shape[0]
    scale = 1.0 / math.sqrt(D // num_heads)
    wqkv = jnp.concatenate([params["wq"] * scale, params["wk"], params["wv"]], axis=1)
    bqkv = jnp.concatenate([params["bq"] * scale, params["bk"], params["bv"]], axis=0)
    return {
        "wqkv": wqkv.astype(compute_dtype),                    # (D, 3D)
        "bqkv": bqkv.reshape(1, 3 * D).astype(jnp.float32),    # (1, 3D)
        "wp": params["wp"].astype(compute_dtype),              # (D, D)
        "bp": params["bp"].reshape(1, D).astype(jnp.float32),  # (1, D)
    }


def multi_head_attention(x, prepared, num_heads):
    """Forward pass of the PyTorch MultiHeadAttention module (eval mode)."""
    B, S, D = x.shape
    qkv = fused_linear(x.reshape(B * S, D), prepared["wqkv"], prepared["bqkv"])
    qkv = qkv.reshape(B, S, 3 * D)               # free reshape, no transpose
    return flash_attention_proj(qkv, prepared["wp"], prepared["bp"], num_heads,
                                out_dtype=x.dtype)


# ----------------------------------------------------------------------------
# Pure-JAX f32 reference for a sanity check.
# ----------------------------------------------------------------------------
def reference(x, params, num_heads):
    B, S, D = x.shape
    Dh = D // num_heads
    q = (x @ params["wq"] + params["bq"]).reshape(B, S, num_heads, Dh).transpose(0, 2, 1, 3)
    k = (x @ params["wk"] + params["bk"]).reshape(B, S, num_heads, Dh).transpose(0, 2, 1, 3)
    v = (x @ params["wv"] + params["bv"]).reshape(B, S, num_heads, Dh).transpose(0, 2, 1, 3)
    s = jnp.einsum("bhqd,bhkd->bhqk", q, k) / math.sqrt(Dh)
    p = jax.nn.softmax(s, axis=-1)
    o = jnp.einsum("bhqk,bhkd->bhqd", p, v)
    o = o.transpose(0, 2, 1, 3).reshape(B, S, D)
    return o @ params["wp"] + params["bp"]


if __name__ == "__main__":
    # Small, module-consistent shapes: (batch, num_image_tokens, dim), head_dim = 8
    B, S, D, H = 2, 8, 32, 4

    key = jax.random.PRNGKey(0)
    keys = jax.random.split(key, 9)
    bound = 1.0 / math.sqrt(D)  # nn.Linear default init scale

    params = {
        "wq": jax.random.uniform(keys[0], (D, D), jnp.float32, -bound, bound),
        "bq": jax.random.uniform(keys[1], (D,), jnp.float32, -bound, bound),
        "wk": jax.random.uniform(keys[2], (D, D), jnp.float32, -bound, bound),
        "bk": jax.random.uniform(keys[3], (D,), jnp.float32, -bound, bound),
        "wv": jax.random.uniform(keys[4], (D, D), jnp.float32, -bound, bound),
        "bv": jax.random.uniform(keys[5], (D,), jnp.float32, -bound, bound),
        "wp": jax.random.uniform(keys[6], (D, D), jnp.float32, -bound, bound),
        "bp": jax.random.uniform(keys[7], (D,), jnp.float32, -bound, bound),
    }
    x = jax.random.normal(keys[8], (B, S, D), jnp.float32)

    prepared = prepare_params(params, num_heads=H)          # one-time prep, off hot path
    fwd = jax.jit(partial(multi_head_attention, num_heads=H))
    out = jax.block_until_ready(fwd(x, prepared))

    ref = reference(x, params, num_heads=H)
    assert out.shape == (B, S, D)
    # bf16 MXU operands + EUP approx reciprocal => loosened tolerance vs f32 reference
    assert jnp.allclose(out, ref, atol=2e-2, rtol=2e-2), (
        "mismatch vs reference: max abs err "
        f"{float(jnp.max(jnp.abs(out - ref)))}")
    print("KERNEL_OK")
</pallas_src>

<mosaic_0001>
module attributes {stable_mosaic.version = 11 : i64} {
  func.func @_matmul_bias_kernel(%arg0: i32, %arg1: i32, %arg2: i32, %arg3: memref<16x32xf32, #tpu.memory_space<vmem>>, %arg4: memref<32x96xbf16, #tpu.memory_space<vmem>>, %arg5: memref<1x96xf32, #tpu.memory_space<vmem>>, %arg6: memref<16x96xbf16, #tpu.memory_space<vmem>>, %arg7: memref<16x96xf32, #tpu.memory_space<vmem>>) attributes {dimension_semantics = [#tpu.dimension_semantics<parallel>, #tpu.dimension_semantics<parallel>, #tpu.dimension_semantics<arbitrary>], iteration_bounds = array<i64: 1, 1, 1>, scalar_prefetch = 0 : i64, scratch_operands = 1 : i64, tpu.core_type = #tpu.core_type<tc>, window_params = [{transform_indices = @transform_0, window_bounds = array<i64: 16, 32>}, {transform_indices = @transform_1, window_bounds = array<i64: 32, 96>}, {transform_indices = @transform_2, window_bounds = array<i64: 1, 96>}, {transform_indices = @transform_3, window_bounds = array<i64: 16, 96>}]} {
    %c0_i32 = arith.constant 0 : i32
    %0 = arith.cmpi eq, %arg2, %c0_i32 : i32
    %1 = arith.extui %0 : i1 to i32
    %c0_i32_0 = arith.constant 0 : i32
    %2 = arith.cmpi ne, %1, %c0_i32_0 : i32
    scf.if %2 {
      %cst_10 = arith.constant 0.000000e+00 : f32
      %13 = vector.broadcast %cst_10 : f32 to vector<16x96xf32>
      %c0_11 = arith.constant 0 : index
      %c0_12 = arith.constant 0 : index
      %14 = vector.load %arg7[%c0_11, %c0_12] : memref<16x96xf32, #tpu.memory_space<vmem>>, vector<16x96xf32>
      tpu.vector_store %arg7[%c0_11, %c0_12], %13 {strides = array<i32>} : memref<16x96xf32, #tpu.memory_space<vmem>>, vector<16x96xf32>,
    } else {
    }
    %c0 = arith.constant 0 : index
    %c0_1 = arith.constant 0 : index
    %3 = vector.load %arg7[%c0, %c0_1] : memref<16x96xf32, #tpu.memory_space<vmem>>, vector<16x96xf32>
    %c0_2 = arith.constant 0 : index
    %c0_3 = arith.constant 0 : index
    %4 = vector.load %arg3[%c0_2, %c0_3] : memref<16x32xf32, #tpu.memory_space<vmem>>, vector<16x32xf32>
    %5 = arith.truncf %4 : vector<16x32xf32> to vector<16x32xbf16>
    %c0_4 = arith.constant 0 : index
    %c0_5 = arith.constant 0 : index
    %6 = vector.load %arg4[%c0_4, %c0_5] : memref<32x96xbf16, #tpu.memory_space<vmem>>, vector<32x96xbf16>
    %cst = arith.constant dense<0.000000e+00> : vector<16x96xf32>
    %7 = tpu.matmul %5, %6, %cst {dimension_numbers = #tpu.dot_dimension_numbers<[1], [0], [0], [1], [0, 0, 1, 1], [], []>} : vector<16x32xbf16>, vector<32x96xbf16>, vector<16x96xf32> -> vector<16x96xf32>
    %8 = arith.addf %3, %7 : vector<16x96xf32>
    %c0_6 = arith.constant 0 : index
    %c0_7 = arith.constant 0 : index
    %9 = vector.load %arg7[%c0_6, %c0_7] : memref<16x96xf32, #tpu.memory_space<vmem>>, vector<16x96xf32>
    tpu.vector_store %arg7[%c0_6, %c0_7], %8 {strides = array<i32>} : memref<16x96xf32, #tpu.memory_space<vmem>>, vector<16x96xf32>,
    %c0_i32_8 = arith.constant 0 : i32
    %10 = arith.cmpi eq, %arg2, %c0_i32_8 : i32
    %11 = arith.extui %10 : i1 to i32
    %c0_i32_9 = arith.constant 0 : i32
    %12 = arith.cmpi ne, %11, %c0_i32_9 : i32
    scf.if %12 {
      %c0_10 = arith.constant 0 : index
      %c0_11 = arith.constant 0 : index
      %13 = vector.load %arg7[%c0_10, %c0_11] : memref<16x96xf32, #tpu.memory_space<vmem>>, vector<16x96xf32>
      %c0_12 = arith.constant 0 : index
      %c0_13 = arith.constant 0 : index
      %14 = vector.load %arg5[%c0_12, %c0_13] : memref<1x96xf32, #tpu.memory_space<vmem>>, vector<1x96xf32>
      %15 = vector.broadcast %14 : vector<1x96xf32> to vector<16x96xf32>
      %16 = arith.addf %13, %15 : vector<16x96xf32>
      %17 = arith.truncf %16 : vector<16x96xf32> to vector<16x96xbf16>
      %c0_14 = arith.constant 0 : index
      %c0_15 = arith.constant 0 : index
      %18 = vector.load %arg6[%c0_14, %c0_15] : memref<16x96xbf16, #tpu.memory_space<vmem>>, vector<16x96xbf16>
      tpu.vector_store %arg6[%c0_14, %c0_15], %17 {strides = array<i32>} : memref<16x96xbf16, #tpu.memory_space<vmem>>, vector<16x96xbf16>,
    } else {
    }
    return
  }
  func.func @transform_0(%arg0: i32, %arg1: i32, %arg2: i32) -> (i32, i32) {
    %c0_i32 = arith.constant 0 : i32
    return %arg0, %arg2 : i32, i32
  }
  func.func @transform_1(%arg0: i32, %arg1: i32, %arg2: i32) -> (i32, i32) {
    %c0_i32 = arith.constant 0 : i32
    return %arg2, %arg1 : i32, i32
  }
  func.func @transform_2(%arg0: i32, %arg1: i32, %arg2: i32) -> (i32, i32) {
    %c0_i32 = arith.constant 0 : i32
    %c0_i32_0 = arith.constant 0 : i32
    return %c0_i32, %arg1 : i32, i32
  }
  func.func @transform_3(%arg0: i32, %arg1: i32, %arg2: i32) -> (i32, i32) {
    %c0_i32 = arith.constant 0 : i32
    return %arg0, %arg1 : i32, i32
  }
}

module attributes {stable_mosaic.version = 11 : i64} {
  func.func @_mha_flash_kernel(%arg0: i32, %arg1: i32, %arg2: i32, %arg3: memref<1x8x96xbf16, #tpu.memory_space<vmem>>, %arg4: memref<1x8x96xbf16, #tpu.memory_space<vmem>>, %arg5: memref<32x32xbf16, #tpu.memory_space<vmem>>, %arg6: memref<1x32xf32, #tpu.memory_space<vmem>>, %arg7: memref<1x8x32xf32, #tpu.memory_space<vmem>>, %arg8: memref<4x8x1xf32, #tpu.memory_space<vmem>>, %arg9: memref<4x8x1xf32, #tpu.memory_space<vmem>>, %arg10: memref<4x8x8xf32, #tpu.memory_space<vmem>>) attributes {dimension_semantics = [#tpu.dimension_semantics<parallel>, #tpu.dimension_semantics<parallel>, #tpu.dimension_semantics<arbitrary>], iteration_bounds = array<i64: 2, 1, 1>, scalar_prefetch = 0 : i64, scratch_operands = 3 : i64, tpu.core_type = #tpu.core_type<tc>, window_params = [{transform_indices = @transform_0, window_bounds = array<i64: 1, 8, 96>}, {transform_indices = @transform_1, window_bounds = array<i64: 1, 8, 96>}, {pipeline_mode = #tpu.pipeline_mode<synchronous>, transform_indices = @transform_2, window_bounds = array<i64: 32, 32>}, {pipeline_mode = #tpu.pipeline_mode<synchronous>, transform_indices = @transform_3, window_bounds = array<i64: 1, 32>}, {transform_indices = @transform_4, window_bounds = array<i64: 1, 8, 32>}]} {
    %c0_i32 = arith.constant 0 : i32
    %0 = arith.cmpi eq, %arg2, %c0_i32 : i32
    %1 = arith.extui %0 : i1 to i32
    %c0_i32_0 = arith.constant 0 : i32
    %2 = arith.cmpi ne, %1, %c0_i32_0 : i32
    scf.if %2 {
      %cst_111 = arith.constant 0xFF800000 : f32
      %162 = vector.broadcast %cst_111 : f32 to vector<4x8x1xf32>
      %c0_112 = arith.constant 0 : index
      %c0_113 = arith.constant 0 : index
      %c0_114 = arith.constant 0 : index
      %163 = vector.load %arg8[%c0_112, %c0_113, %c0_114] : memref<4x8x1xf32, #tpu.memory_space<vmem>>, vector<4x8x1xf32>
      tpu.vector_store %arg8[%c0_112, %c0_113, %c0_114], %162 {strides = array<i32>} : memref<4x8x1xf32, #tpu.memory_space<vmem>>, vector<4x8x1xf32>,
      %cst_115 = arith.constant 0.000000e+00 : f32
      %164 = vector.broadcast %cst_115 : f32 to vector<4x8x1xf32>
      %c0_116 = arith.constant 0 : index
      %c0_117 = arith.constant 0 : index
      %c0_118 = arith.constant 0 : index
      %165 = vector.load %arg9[%c0_116, %c0_117, %c0_118] : memref<4x8x1xf32, #tpu.memory_space<vmem>>, vector<4x8x1xf32>
      tpu.vector_store %arg9[%c0_116, %c0_117, %c0_118], %164 {strides = array<i32>} : memref<4x8x1xf32, #tpu.memory_space<vmem>>, vector<4x8x1xf32>,
      %cst_119 = arith.constant 0.000000e+00 : f32
      %166 = vector.broadcast %cst_119 : f32 to vector<4x8x8xf32>
      %c0_120 = arith.constant 0 : index
      %c0_121 = arith.constant 0 : index
      %c0_122 = arith.constant 0 : index
      %167 = vector.load %arg10[%c0_120, %c0_121, %c0_122] : memref<4x8x8xf32, #tpu.memory_space<vmem>>, vector<4x8x8xf32>
      tpu.vector_store %arg10[%c0_120, %c0_121, %c0_122], %166 {strides = array<i32>} : memref<4x8x8xf32, #tpu.memory_space<vmem>>, vector<4x8x8xf32>,
    } else {
    }
    %c0 = arith.constant 0 : index
    %c0_1 = arith.constant 0 : index
    %c0_2 = arith.constant 0 : index
    %3 = vector.load %arg3[%c0, %c0_1, %c0_2] : memref<1x8x96xbf16, #tpu.memory_space<vmem>>, vector<1x8x8xbf16>
    %4 = vector.shape_cast %3 : vector<1x8x8xbf16> to vector<8x8xbf16>
    %c0_3 = arith.constant 0 : index
    %c0_4 = arith.constant 0 : index
    %c32 = arith.constant 32 : index
    %5 = vector.load %arg4[%c0_3, %c0_4, %c32] : memref<1x8x96xbf16, #tpu.memory_space<vmem>>, vector<1x8x8xbf16>
    %6 = vector.shape_cast %5 : vector<1x8x8xbf16> to vector<8x8xbf16>
    %c0_5 = arith.constant 0 : index
    %c0_6 = arith.constant 0 : index
    %c64 = arith.constant 64 : index
    %7 = vector.load %arg4[%c0_5, %c0_6, %c64] : memref<1x8x96xbf16, #tpu.memory_space<vmem>>, vector<1x8x8xbf16>
    %8 = vector.shape_cast %7 : vector<1x8x8xbf16> to vector<8x8xbf16>
    %cst = arith.constant dense<0.000000e+00> : vector<8x8xf32>
    %9 = tpu.matmul %4, %6, %cst {dimension_numbers = #tpu.dot_dimension_numbers<[1], [1], [0], [0], [0, 0, 1, 0], [], []>} : vector<8x8xbf16>, vector<8x8xbf16>, vector<8x8xf32> -> vector<8x8xf32>
    %c0_7 = arith.constant 0 : index
    %c0_8 = arith.constant 0 : index
    %c0_9 = arith.constant 0 : index
    %10 = vector.load %arg8[%c0_7, %c0_8, %c0_9] : memref<4x8x1xf32, #tpu.memory_space<vmem>>, vector<1x8x1xf32>
    %11 = vector.shape_cast %10 : vector<1x8x1xf32> to vector<8x1xf32>
    %cst_10 = arith.constant dense<0xFF800000> : vector<8xf32>
    %12 = vector.multi_reduction <maximumf>, %9, %cst_10 [1] : vector<8x8xf32> to vector<8xf32>
    %13 = vector.shape_cast %12 : vector<8xf32> to vector<8x1xf32>
    %14 = arith.maximumf %11, %13 : vector<8x1xf32>
    %15 = arith.subf %11, %14 : vector<8x1xf32>
    %16 = math.exp %15 : vector<8x1xf32>
    %17 = vector.broadcast %14 : vector<8x1xf32> to vector<8x8xf32>
    %18 = arith.subf %9, %17 : vector<8x8xf32>
    %19 = math.exp %18 : vector<8x8xf32>
    %c0_11 = arith.constant 0 : index
    %c0_12 = arith.constant 0 : index
    %c0_13 = arith.constant 0 : index
    %20 = vector.load %arg9[%c0_11, %c0_12, %c0_13] : memref<4x8x1xf32, #tpu.memory_space<vmem>>, vector<1x8x1xf32>
    %21 = vector.shape_cast %20 : vector<1x8x1xf32> to vector<8x1xf32>
    %22 = arith.mulf %16, %21 : vector<8x1xf32>
    %cst_14 = arith.constant dense<0.000000e+00> : vector<8xf32>
    %23 = vector.multi_reduction <add>, %19, %cst_14 [1] : vector<8x8xf32> to vector<8xf32>
    %24 = vector.shape_cast %23 : vector<8xf32> to vector<8x1xf32>
    %25 = arith.addf %22, %24 : vector<8x1xf32>
    %c0_15 = arith.constant 0 : index
    %c0_16 = arith.constant 0 : index
    %c0_17 = arith.constant 0 : index
    %26 = vector.load %arg9[%c0_15, %c0_16, %c0_17] : memref<4x8x1xf32, #tpu.memory_space<vmem>>, vector<1x8x1xf32>
    %27 = vector.shape_cast %26 : vector<1x8x1xf32> to vector<8x1xf32>
    %28 = vector.shape_cast %25 : vector<8x1xf32> to vector<1x8x1xf32>
    tpu.vector_store %arg9[%c0_15, %c0_16, %c0_17], %28 {strides = array<i32>} : memref<4x8x1xf32, #tpu.memory_space<vmem>>, vector<1x8x1xf32>,
    %c0_18 = arith.constant 0 : index
    %c0_19 = arith.constant 0 : index
    %c0_20 = arith.constant 0 : index
    %29 = vector.load %arg10[%c0_18, %c0_19, %c0_20] : memref<4x8x8xf32, #tpu.memory_space<vmem>>, vector<1x8x8xf32>
    %30 = vector.shape_cast %29 : vector<1x8x8xf32> to vector<8x8xf32>
    %31 = vector.broadcast %16 : vector<8x1xf32> to vector<8x8xf32>
    %32 = arith.mulf %31, %30 : vector<8x8xf32>
    %33 = arith.truncf %19 : vector<8x8xf32> to vector<8x8xbf16>
    %cst_21 = arith.constant dense<0.000000e+00> : vector<8x8xf32>
    %34 = tpu.matmul %33, %8, %cst_21 {dimension_numbers = #tpu.dot_dimension_numbers<[1], [0], [0], [1], [0, 0, 1, 1], [], []>} : vector<8x8xbf16>, vector<8x8xbf16>, vector<8x8xf32> -> vector<8x8xf32>
    %35 = arith.addf %32, %34 : vector<8x8xf32>
    %c0_22 = arith.constant 0 : index
    %c0_23 = arith.constant 0 : index
    %c0_24 = arith.constant 0 : index
    %36 = vector.load %arg10[%c0_22, %c0_23, %c0_24] : memref<4x8x8xf32, #tpu.memory_space<vmem>>, vector<1x8x8xf32>
    %37 = vector.shape_cast %36 : vector<1x8x8xf32> to vector<8x8xf32>
    %38 = vector.shape_cast %35 : vector<8x8xf32> to vector<1x8x8xf32>
    tpu.vector_store %arg10[%c0_22, %c0_23, %c0_24], %38 {strides = array<i32>} : memref<4x8x8xf32, #tpu.memory_space<vmem>>, vector<1x8x8xf32>,
    %c0_25 = arith.constant 0 : index
    %c0_26 = arith.constant 0 : index
    %c0_27 = arith.constant 0 : index
    %39 = vector.load %arg8[%c0_25, %c0_26, %c0_27] : memref<4x8x1xf32, #tpu.memory_space<vmem>>, vector<1x8x1xf32>
    %40 = vector.shape_cast %39 : vector<1x8x1xf32> to vector<8x1xf32>
    %41 = vector.shape_cast %14 : vector<8x1xf32> to vector<1x8x1xf32>
    tpu.vector_store %arg8[%c0_25, %c0_26, %c0_27], %41 {strides = array<i32>} : memref<4x8x1xf32, #tpu.memory_space<vmem>>, vector<1x8x1xf32>,
    %c0_28 = arith.constant 0 : index
    %c0_29 = arith.constant 0 : index
    %c8 = arith.constant 8 : index
    %42 = vector.load %arg3[%c0_28, %c0_29, %c8] : memref<1x8x96xbf16, #tpu.memory_space<vmem>>, vector<1x8x8xbf16>
    %43 = vector.shape_cast %42 : vector<1x8x8xbf16> to vector<8x8xbf16>
    %c0_30 = arith.constant 0 : index
    %c0_31 = arith.constant 0 : index
    %c40 = arith.constant 40 : index
    %44 = vector.load %arg4[%c0_30, %c0_31, %c40] : memref<1x8x96xbf16, #tpu.memory_space<vmem>>, vector<1x8x8xbf16>
    %45 = vector.shape_cast %44 : vector<1x8x8xbf16> to vector<8x8xbf16>
    %c0_32 = arith.constant 0 : index
    %c0_33 = arith.constant 0 : index
    %c72 = arith.constant 72 : index
    %46 = vector.load %arg4[%c0_32, %c0_33, %c72] : memref<1x8x96xbf16, #tpu.memory_space<vmem>>, vector<1x8x8xbf16>
    %47 = vector.shape_cast %46 : vector<1x8x8xbf16> to vector<8x8xbf16>
    %cst_34 = arith.constant dense<0.000000e+00> : vector<8x8xf32>
    %48 = tpu.matmul %43, %45, %cst_34 {dimension_numbers = #tpu.dot_dimension_numbers<[1], [1], [0], [0], [0, 0, 1, 0], [], []>} : vector<8x8xbf16>, vector<8x8xbf16>, vector<8x8xf32> -> vector<8x8xf32>
    %c1 = arith.constant 1 : index
    %c0_35 = arith.constant 0 : index
    %c0_36 = arith.constant 0 : index
    %49 = vector.load %arg8[%c1, %c0_35, %c0_36] : memref<4x8x1xf32, #tpu.memory_space<vmem>>, vector<1x8x1xf32>
    %50 = vector.shape_cast %49 : vector<1x8x1xf32> to vector<8x1xf32>
    %cst_37 = arith.constant dense<0xFF800000> : vector<8xf32>
    %51 = vector.multi_reduction <maximumf>, %48, %cst_37 [1] : vector<8x8xf32> to vector<8xf32>
    %52 = vector.shape_cast %51 : vector<8xf32> to vector<8x1xf32>
    %53 = arith.maximumf %50, %52 : vector<8x1xf32>
    %54 = arith.subf %50, %53 : vector<8x1xf32>
    %55 = math.exp %54 : vector<8x1xf32>
    %56 = vector.broadcast %53 : vector<8x1xf32> to vector<8x8xf32>
    %57 = arith.subf %48, %56 : vector<8x8xf32>
    %58 = math.exp %57 : vector<8x8xf32>
    %c1_38 = arith.constant 1 : index
    %c0_39 = arith.constant 0 : index
    %c0_40 = arith.constant 0 : index
    %59 = vector.load %arg9[%c1_38, %c0_39, %c0_40] : memref<4x8x1xf32, #tpu.memory_space<vmem>>, vector<1x8x1xf32>
    %60 = vector.shape_cast %59 : vector<1x8x1xf32> to vector<8x1xf32>
    %61 = arith.mulf %55, %60 : vector<8x1xf32>
    %cst_41 = arith.constant dense<0.000000e+00> : vector<8xf32>
    %62 = vector.multi_reduction <add>, %58, %cst_41 [1] : vector<8x8xf32> to vector<8xf32>
    %63 = vector.shape_cast %62 : vector<8xf32> to vector<8x1xf32>
    %64 = arith.addf %61, %63 : vector<8x1xf32>
    %c1_42 = arith.constant 1 : index
    %c0_43 = arith.constant 0 : index
    %c0_44 = arith.constant 0 : index
    %65 = vector.load %arg9[%c1_42, %c0_43, %c0_44] : memref<4x8x1xf32, #tpu.memory_space<vmem>>, vector<1x8x1xf32>
    %66 = vector.shape_cast %65 : vector<1x8x1xf32> to vector<8x1xf32>
    %67 = vector.shape_cast %64 : vector<8x1xf32> to vector<1x8x1xf32>
    tpu.vector_store %arg9[%c1_42, %c0_43, %c0_44], %67 {strides = array<i32>} : memref<4x8x1xf32, #tpu.memory_space<vmem>>, vector<1x8x1xf32>,
    %c1_45 = arith.constant 1 : index
    %c0_46 = arith.constant 0 : index
    %c0_47 = arith.constant 0 : index
    %68 = vector.load %arg10[%c1_45, %c0_46, %c0_47] : memref<4x8x8xf32, #tpu.memory_space<vmem>>, vector<1x8x8xf32>
    %69 = vector.shape_cast %68 : vector<1x8x8xf32> to vector<8x8xf32>
    %70 = vector.broadcast %55 : vector<8x1xf32> to vector<8x8xf32>
    %71 = arith.mulf %70, %69 : vector<8x8xf32>
    %72 = arith.truncf %58 : vector<8x8xf32> to vector<8x8xbf16>
    %cst_48 = arith.constant dense<0.000000e+00> : vector<8x8xf32>
    %73 = tpu.matmul %72, %47, %cst_48 {dimension_numbers = #tpu.dot_dimension_numbers<[1], [0], [0], [1], [0, 0, 1, 1], [], []>} : vector<8x8xbf16>, vector<8x8xbf16>, vector<8x8xf32> -> vector<8x8xf32>
    %74 = arith.addf %71, %73 : vector<8x8xf32>
    %c1_49 = arith.constant 1 : index
    %c0_50 = arith.constant 0 : index
    %c0_51 = arith.constant 0 : index
    %75 = vector.load %arg10[%c1_49, %c0_50, %c0_51] : memref<4x8x8xf32, #tpu.memory_space<vmem>>, vector<1x8x8xf32>
    %76 = vector.shape_cast %75 : vector<1x8x8xf32> to vector<8x8xf32>
    %77 = vector.shape_cast %74 : vector<8x8xf32> to vector<1x8x8xf32>
    tpu.vector_store %arg10[%c1_49, %c0_50, %c0_51], %77 {strides = array<i32>} : memref<4x8x8xf32, #tpu.memory_space<vmem>>, vector<1x8x8xf32>,
    %c1_52 = arith.constant 1 : index
    %c0_53 = arith.constant 0 : index
    %c0_54 = arith.constant 0 : index
    %78 = vector.load %arg8[%c1_52, %c0_53, %c0_54] : memref<4x8x1xf32, #tpu.memory_space<vmem>>, vector<1x8x1xf32>
    %79 = vector.shape_cast %78 : vector<1x8x1xf32> to vector<8x1xf32>
    %80 = vector.shape_cast %53 : vector<8x1xf32> to vector<1x8x1xf32>
    tpu.vector_store %arg8[%c1_52, %c0_53, %c0_54], %80 {strides = array<i32>} : memref<4x8x1xf32, #tpu.memory_space<vmem>>, vector<1x8x1xf32>,
    %c0_55 = arith.constant 0 : index
    %c0_56 = arith.constant 0 : index
    %c16 = arith.constant 16 : index
    %81 = vector.load %arg3[%c0_55, %c0_56, %c16] : memref<1x8x96xbf16, #tpu.memory_space<vmem>>, vector<1x8x8xbf16>
    %82 = vector.shape_cast %81 : vector<1x8x8xbf16> to vector<8x8xbf16>
    %c0_57 = arith.constant 0 : index
    %c0_58 = arith.constant 0 : index
    %c48 = arith.constant 48 : index
    %83 = vector.load %arg4[%c0_57, %c0_58, %c48] : memref<1x8x96xbf16, #tpu.memory_space<vmem>>, vector<1x8x8xbf16>
    %84 = vector.shape_cast %83 : vector<1x8x8xbf16> to vector<8x8xbf16>
    %c0_59 = arith.constant 0 : index
    %c0_60 = arith.constant 0 : index
    %c80 = arith.constant 80 : index
    %85 = vector.load %arg4[%c0_59, %c0_60, %c80] : memref<1x8x96xbf16, #tpu.memory_space<vmem>>, vector<1x8x8xbf16>
    %86 = vector.shape_cast %85 : vector<1x8x8xbf16> to vector<8x8xbf16>
    %cst_61 = arith.constant dense<0.000000e+00> : vector<8x8xf32>
    %87 = tpu.matmul %82, %84, %cst_61 {dimension_numbers = #tpu.dot_dimension_numbers<[1], [1], [0], [0], [0, 0, 1, 0], [], []>} : vector<8x8xbf16>, vector<8x8xbf16>, vector<8x8xf32> -> vector<8x8xf32>
    %c2 = arith.constant 2 : index
    %c0_62 = arith.constant 0 : index
    %c0_63 = arith.constant 0 : index
    %88 = vector.load %arg8[%c2, %c0_62, %c0_63] : memref<4x8x1xf32, #tpu.memory_space<vmem>>, vector<1x8x1xf32>
    %89 = vector.shape_cast %88 : vector<1x8x1xf32> to vector<8x1xf32>
    %cst_64 = arith.constant dense<0xFF800000> : vector<8xf32>
    %90 = vector.multi_reduction <maximumf>, %87, %cst_64 [1] : vector<8x8xf32> to vector<8xf32>
    %91 = vector.shape_cast %90 : vector<8xf32> to vector<8x1xf32>
    %92 = arith.maximumf %89, %91 : vector<8x1xf32>
    %93 = arith.subf %89, %92 : vector<8x1xf32>
    %94 = math.exp %93 : vector<8x1xf32>
    %95 = vector.broadcast %92 : vector<8x1xf32> to vector<8x8xf32>
    %96 = arith.subf %87, %95 : vector<8x8xf32>
    %97 = math.exp %96 : vector<8x8xf32>
    %c2_65 = arith.constant 2 : index
    %c0_66 = arith.constant 0 : index
    %c0_67 = arith.constant 0 : index
    %98 = vector.load %arg9[%c2_65, %c0_66, %c0_67] : memref<4x8x1xf32, #tpu.memory_space<vmem>>, vector<1x8x1xf32>
    %99 = vector.shape_cast %98 : vector<1x8x1xf32> to vector<8x1xf32>
    %100 = arith.mulf %94, %99 : vector<8x1xf32>
    %cst_68 = arith.constant dense<0.000000e+00> : vector<8xf32>
    %101 = vector.multi_reduction <add>, %97, %cst_68 [1] : vector<8x8xf32> to vector<8xf32>
    %102 = vector.shape_cast %101 : vector<8xf32> to vector<8x1xf32>
    %103 = arith.addf %100, %102 : vector<8x1xf32>
    %c2_69 = arith.constant 2 : index
    %c0_70 = arith.constant 0 : index
    %c0_71 = arith.constant 0 : index
    %104 = vector.load %arg9[%c2_69, %c0_70, %c0_71] : memref<4x8x1xf32, #tpu.memory_space<vmem>>, vector<1x8x1xf32>
    %105 = vector.shape_cast %104 : vector<1x8x1xf32> to vector<8x1xf32>
    %106 = vector.shape_cast %103 : vector<8x1xf32> to vector<1x8x1xf32>
    tpu.vector_store %arg9[%c2_69, %c0_70, %c0_71], %106 {strides = array<i32>} : memref<4x8x1xf32, #tpu.memory_space<vmem>>, vector<1x8x1xf32>,
    %c2_72 = arith.constant 2 : index
    %c0_73 = arith.constant 0 : index
    %c0_74 = arith.constant 0 : index
    %107 = vector.load %arg10[%c2_72, %c0_73, %c0_74] : memref<4x8x8xf32, #tpu.memory_space<vmem>>, vector<1x8x8xf32>
    %108 = vector.shape_cast %107 : vector<1x8x8xf32> to vector<8x8xf32>
    %109 = vector.broadcast %94 : vector<8x1xf32> to vector<8x8xf32>
    %110 = arith.mulf %109, %108 : vector<8x8xf32>
    %111 = arith.truncf %97 : vector<8x8xf32> to vector<8x8xbf16>
    %cst_75 = arith.constant dense<0.000000e+00> : vector<8x8xf32>
    %112 = tpu.matmul %111, %86, %cst_75 {dimension_numbers = #tpu.dot_dimension_numbers<[1], [0], [0], [1], [0, 0, 1, 1], [], []>} : vector<8x8xbf16>, vector<8x8xbf16>, vector<8x8xf32> -> vector<8x8xf32>
    %113 = arith.addf %110, %112 : vector<8x8xf32>
    %c2_76 = arith.constant 2 : index
    %c0_77 = arith.constant 0 : index
    %c0_78 = arith.constant 0 : index
    %114 = vector.load %arg10[%c2_76, %c0_77, %c0_78] : memref<4x8x8xf32, #tpu.memory_space<vmem>>, vector<1x8x8xf32>
    %115 = vector.shape_cast %114 : vector<1x8x8xf32> to vector<8x8xf32>
    %116 = vector.shape_cast %113 : vector<8x8xf32> to vector<1x8x8xf32>
    tpu.vector_store %arg10[%c2_76, %c0_77, %c0_78], %116 {strides = array<i32>} : memref<4x8x8xf32, #tpu.memory_space<vmem>>, vector<1x8x8xf32>,
    %c2_79 = arith.constant 2 : index
    %c0_80 = arith.constant 0 : index
    %c0_81 = arith.constant 0 : index
    %117 = vector.load %arg8[%c2_79, %c0_80, %c0_81] : memref<4x8x1xf32, #tpu.memory_space<vmem>>, vector<1x8x1xf32>
    %118 = vector.shape_cast %117 : vector<1x8x1xf32> to vector<8x1xf32>
    %119 = vector.shape_cast %92 : vector<8x1xf32> to vector<1x8x1xf32>
    tpu.vector_store %arg8[%c2_79, %c0_80, %c0_81], %119 {strides = array<i32>} : memref<4x8x1xf32, #tpu.memory_space<vmem>>, vector<1x8x1xf32>,
    %c0_82 = arith.constant 0 : index
    %c0_83 = arith.constant 0 : index
    %c24 = arith.constant 24 : index
    %120 = vector.load %arg3[%c0_82, %c0_83, %c24] : memref<1x8x96xbf16, #tpu.memory_space<vmem>>, vector<1x8x8xbf16>
    %121 = vector.shape_cast %120 : vector<1x8x8xbf16> to vector<8x8xbf16>
    %c0_84 = arith.constant 0 : index
    %c0_85 = arith.constant 0 : index
    %c56 = arith.constant 56 : index
    %122 = vector.load %arg4[%c0_84, %c0_85, %c56] : memref<1x8x96xbf16, #tpu.memory_space<vmem>>, vector<1x8x8xbf16>
    %123 = vector.shape_cast %122 : vector<1x8x8xbf16> to vector<8x8xbf16>
    %c0_86 = arith.constant 0 : index
    %c0_87 = arith.constant 0 : index
    %c88 = arith.constant 88 : index
    %124 = vector.load %arg4[%c0_86, %c0_87, %c88] : memref<1x8x96xbf16, #tpu.memory_space<vmem>>, vector<1x8x8xbf16>
    %125 = vector.shape_cast %124 : vector<1x8x8xbf16> to vector<8x8xbf16>
    %cst_88 = arith.constant dense<0.000000e+00> : vector<8x8xf32>
    %126 = tpu.matmul %121, %123, %cst_88 {dimension_numbers = #tpu.dot_dimension_numbers<[1], [1], [0], [0], [0, 0, 1, 0], [], []>} : vector<8x8xbf16>, vector<8x8xbf16>, vector<8x8xf32> -> vector<8x8xf32>
    %c3 = arith.constant 3 : index
    %c0_89 = arith.constant 0 : index
    %c0_90 = arith.constant 0 : index
    %127 = vector.load %arg8[%c3, %c0_89, %c0_90] : memref<4x8x1xf32, #tpu.memory_space<vmem>>, vector<1x8x1xf32>
    %128 = vector.shape_cast %127 : vector<1x8x1xf32> to vector<8x1xf32>
    %cst_91 = arith.constant dense<0xFF800000> : vector<8xf32>
    %129 = vector.multi_reduction <maximumf>, %126, %cst_91 [1] : vector<8x8xf32> to vector<8xf32>
    %130 = vector.shape_cast %129 : vector<8xf32> to vector<8x1xf32>
    %131 = arith.maximumf %128, %130 : vector<8x1xf32>
    %132 = arith.subf %128, %131 : vector<8x1xf32>
    %133 = math.exp %132 : vector<8x1xf32>
    %134 = vector.broadcast %131 : vector<8x1xf32> to vector<8x8xf32>
    %135 = arith.subf %126, %134 : vector<8x8xf32>
    %136 = math.exp %135 : vector<8x8xf32>
    %c3_92 = arith.constant 3 : index
    %c0_93 = arith.constant 0 : index
    %c0_94 = arith.constant 0 : index
    %137 = vector.load %arg9[%c3_92, %c0_93, %c0_94] : memref<4x8x1xf32, #tpu.memory_space<vmem>>, vector<1x8x1xf32>
    %138 = vector.shape_cast %137 : vector<1x8x1xf32> to vector<8x1xf32>
    %139 = arith.mulf %133, %138 : vector<8x1xf32>
    %cst_95 = arith.constant dense<0.000000e+00> : vector<8xf32>
    %140 = vector.multi_reduction <add>, %136, %cst_95 [1] : vector<8x8xf32> to vector<8xf32>
    %141 = vector.shape_cast %140 : vector<8xf32> to vector<8x1xf32>
    %142 = arith.addf %139, %141 : vector<8x1xf32>
    %c3_96 = arith.constant 3 : index
    %c0_97 = arith.constant 0 : index
    %c0_98 = arith.constant 0 : index
    %143 = vector.load %arg9[%c3_96, %c0_97, %c0_98] : memref<4x8x1xf32, #tpu.memory_space<vmem>>, vector<1x8x1xf32>
    %144 = vector.shape_cast %143 : vector<1x8x1xf32> to vector<8x1xf32>
    %145 = vector.shape_cast %142 : vector<8x1xf32> to vector<1x8x1xf32>
    tpu.vector_store %arg9[%c3_96, %c0_97, %c0_98], %145 {strides = array<i32>} : memref<4x8x1xf32, #tpu.memory_space<vmem>>, vector<1x8x1xf32>,
    %c3_99 = arith.constant 3 : index
    %c0_100 = arith.constant 0 : index
    %c0_101 = arith.constant 0 : index
    %146 = vector.load %arg10[%c3_99, %c0_100, %c0_101] : memref<4x8x8xf32, #tpu.memory_space<vmem>>, vector<1x8x8xf32>
    %147 = vector.shape_cast %146 : vector<1x8x8xf32> to vector<8x8xf32>
    %148 = vector.broadcast %133 : vector<8x1xf32> to vector<8x8xf32>
    %149 = arith.mulf %148, %147 : vector<8x8xf32>
    %150 = arith.truncf %136 : vector<8x8xf32> to vector<8x8xbf16>
    %cst_102 = arith.constant dense<0.000000e+00> : vector<8x8xf32>
    %151 = tpu.matmul %150, %125, %cst_102 {dimension_numbers = #tpu.dot_dimension_numbers<[1], [0], [0], [1], [0, 0, 1, 1], [], []>} : vector<8x8xbf16>, vector<8x8xbf16>, vector<8x8xf32> -> vector<8x8xf32>
    %152 = arith.addf %149, %151 : vector<8x8xf32>
    %c3_103 = arith.constant 3 : index
    %c0_104 = arith.constant 0 : index
    %c0_105 = arith.constant 0 : index
    %153 = vector.load %arg10[%c3_103, %c0_104, %c0_105] : memref<4x8x8xf32, #tpu.memory_space<vmem>>, vector<1x8x8xf32>
    %154 = vector.shape_cast %153 : vector<1x8x8xf32> to vector<8x8xf32>
    %155 = vector.shape_cast %152 : vector<8x8xf32> to vector<1x8x8xf32>
    tpu.vector_store %arg10[%c3_103, %c0_104, %c0_105], %155 {strides = array<i32>} : memref<4x8x8xf32, #tpu.memory_space<vmem>>, vector<1x8x8xf32>,
    %c3_106 = arith.constant 3 : index
    %c0_107 = arith.constant 0 : index
    %c0_108 = arith.constant 0 : index
    %156 = vector.load %arg8[%c3_106, %c0_107, %c0_108] : memref<4x8x1xf32, #tpu.memory_space<vmem>>, vector<1x8x1xf32>
    %157 = vector.shape_cast %156 : vector<1x8x1xf32> to vector<8x1xf32>
    %158 = vector.shape_cast %131 : vector<8x1xf32> to vector<1x8x1xf32>
    tpu.vector_store %arg8[%c3_106, %c0_107, %c0_108], %158 {strides = array<i32>} : memref<4x8x1xf32, #tpu.memory_space<vmem>>, vector<1x8x1xf32>,
    %c0_i32_109 = arith.constant 0 : i32
    %159 = arith.cmpi eq, %arg2, %c0_i32_109 : i32
    %160 = arith.extui %159 : i1 to i32
    %c0_i32_110 = arith.constant 0 : i32
    %161 = arith.cmpi ne, %160, %c0_i32_110 : i32
    scf.if %161 {
      %cst_111 = arith.constant 0.000000e+00 : f32
      %162 = vector.broadcast %cst_111 : f32 to vector<8x32xf32>
      %c0_112 = arith.constant 0 : index
      %c0_113 = arith.constant 0 : index
      %c0_114 = arith.constant 0 : index
      %163 = vector.load %arg10[%c0_112, %c0_113, %c0_114] : memref<4x8x8xf32, #tpu.memory_space<vmem>>, vector<1x8x8xf32>
      %164 = vector.shape_cast %163 : vector<1x8x8xf32> to vector<8x8xf32>
      %c0_115 = arith.constant 0 : index
      %c0_116 = arith.constant 0 : index
      %c0_117 = arith.constant 0 : index
      %165 = vector.load %arg9[%c0_115, %c0_116, %c0_117] : memref<4x8x1xf32, #tpu.memory_space<vmem>>, vector<1x8x1xf32>
      %166 = vector.shape_cast %165 : vector<1x8x1xf32> to vector<8x1xf32>
      %167 = tpu.reciprocal %166 {approx = true} : vector<8x1xf32> -> vector<8x1xf32>
      %168 = vector.broadcast %167 : vector<8x1xf32> to vector<8x8xf32>
      %169 = arith.mulf %164, %168 : vector<8x8xf32>
      %c0_118 = arith.constant 0 : index
      %c0_119 = arith.constant 0 : index
      %170 = vector.load %arg5[%c0_118, %c0_119] : memref<32x32xbf16, #tpu.memory_space<vmem>>, vector<8x32xbf16>
      %171 = arith.truncf %169 : vector<8x8xf32> to vector<8x8xbf16>
      %cst_120 = arith.constant dense<0.000000e+00> : vector<8x32xf32>
      %172 = tpu.matmul %171, %170, %cst_120 {dimension_numbers = #tpu.dot_dimension_numbers<[1], [0], [0], [1], [0, 0, 1, 1], [], []>} : vector<8x8xbf16>, vector<8x32xbf16>, vector<8x32xf32> -> vector<8x32xf32>
      %173 = arith.addf %162, %172 : vector<8x32xf32>
      %c1_121 = arith.constant 1 : index
      %c0_122 = arith.constant 0 : index
      %c0_123 = arith.constant 0 : index
      %174 = vector.load %arg10[%c1_121, %c0_122, %c0_123] : memref<4x8x8xf32, #tpu.memory_space<vmem>>, vector<1x8x8xf32>
      %175 = vector.shape_cast %174 : vector<1x8x8xf32> to vector<8x8xf32>
      %c1_124 = arith.constant 1 : index
      %c0_125 = arith.constant 0 : index
      %c0_126 = arith.constant 0 : index
      %176 = vector.load %arg9[%c1_124, %c0_125, %c0_126] : memref<4x8x1xf32, #tpu.memory_space<vmem>>, vector<1x8x1xf32>
      %177 = vector.shape_cast %176 : vector<1x8x1xf32> to vector<8x1xf32>
      %178 = tpu.reciprocal %177 {approx = true} : vector<8x1xf32> -> vector<8x1xf32>
      %179 = vector.broadcast %178 : vector<8x1xf32> to vector<8x8xf32>
      %180 = arith.mulf %175, %179 : vector<8x8xf32>
      %c8_127 = arith.constant 8 : index
      %c0_128 = arith.constant 0 : index
      %181 = vector.load %arg5[%c8_127, %c0_128] : memref<32x32xbf16, #tpu.memory_space<vmem>>, vector<8x32xbf16>
      %182 = arith.truncf %180 : vector<8x8xf32> to vector<8x8xbf16>
      %cst_129 = arith.constant dense<0.000000e+00> : vector<8x32xf32>
      %183 = tpu.matmul %182, %181, %cst_129 {dimension_numbers = #tpu.dot_dimension_numbers<[1], [0], [0], [1], [0, 0, 1, 1], [], []>} : vector<8x8xbf16>, vector<8x32xbf16>, vector<8x32xf32> -> vector<8x32xf32>
      %184 = arith.addf %173, %183 : vector<8x32xf32>
      %c2_130 = arith.constant 2 : index
      %c0_131 = arith.constant 0 : index
      %c0_132 = arith.constant 0 : index
      %185 = vector.load %arg10[%c2_130, %c0_131, %c0_132] : memref<4x8x8xf32, #tpu.memory_space<vmem>>, vector<1x8x8xf32>
      %186 = vector.shape_cast %185 : vector<1x8x8xf32> to vector<8x8xf32>
      %c2_133 = arith.constant 2 : index
      %c0_134 = arith.constant 0 : index
      %c0_135 = arith.constant 0 : index
      %187 = vector.load %arg9[%c2_133, %c0_134, %c0_135] : memref<4x8x1xf32, #tpu.memory_space<vmem>>, vector<1x8x1xf32>
      %188 = vector.shape_cast %187 : vector<1x8x1xf32> to vector<8x1xf32>
      %189 = tpu.reciprocal %188 {approx = true} : vector<8x1xf32> -> vector<8x1xf32>
      %190 = vector.broadcast %189 : vector<8x1xf32> to vector<8x8xf32>
      %191 = arith.mulf %186, %190 : vector<8x8xf32>
      %c16_136 = arith.constant 16 : index
      %c0_137 = arith.constant 0 : index
      %192 = vector.load %arg5[%c16_136, %c0_137] : memref<32x32xbf16, #tpu.memory_space<vmem>>, vector<8x32xbf16>
      %193 = arith.truncf %191 : vector<8x8xf32> to vector<8x8xbf16>
      %cst_138 = arith.constant dense<0.000000e+00> : vector<8x32xf32>
      %194 = tpu.matmul %193, %192, %cst_138 {dimension_numbers = #tpu.dot_dimension_numbers<[1], [0], [0], [1], [0, 0, 1, 1], [], []>} : vector<8x8xbf16>, vector<8x32xbf16>, vector<8x32xf32> -> vector<8x32xf32>
      %195 = arith.addf %184, %194 : vector<8x32xf32>
      %c3_139 = arith.constant 3 : index
      %c0_140 = arith.constant 0 : index
      %c0_141 = arith.constant 0 : index
      %196 = vector.load %arg10[%c3_139, %c0_140, %c0_141] : memref<4x8x8xf32, #tpu.memory_space<vmem>>, vector<1x8x8xf32>
      %197 = vector.shape_cast %196 : vector<1x8x8xf32> to vector<8x8xf32>
      %c3_142 = arith.constant 3 : index
      %c0_143 = arith.constant 0 : index
      %c0_144 = arith.constant 0 : index
      %198 = vector.load %arg9[%c3_142, %c0_143, %c0_144] : memref<4x8x1xf32, #tpu.memory_space<vmem>>, vector<1x8x1xf32>
      %199 = vector.shape_cast %198 : vector<1x8x1xf32> to vector<8x1xf32>
      %200 = tpu.reciprocal %199 {approx = true} : vector<8x1xf32> -> vector<8x1xf32>
      %201 = vector.broadcast %200 : vector<8x1xf32> to vector<8x8xf32>
      %202 = arith.mulf %197, %201 : vector<8x8xf32>
      %c24_145 = arith.constant 24 : index
      %c0_146 = arith.constant 0 : index
      %203 = vector.load %arg5[%c24_145, %c0_146] : memref<32x32xbf16, #tpu.memory_space<vmem>>, vector<8x32xbf16>
      %204 = arith.truncf %202 : vector<8x8xf32> to vector<8x8xbf16>
      %cst_147 = arith.constant dense<0.000000e+00> : vector<8x32xf32>
      %205 = tpu.matmul %204, %203, %cst_147 {dimension_numbers = #tpu.dot_dimension_numbers<[1], [0], [0], [1], [0, 0, 1, 1], [], []>} : vector<8x8xbf16>, vector<8x32xbf16>, vector<8x32xf32> -> vector<8x32xf32>
      %206 = arith.addf %195, %205 : vector<8x32xf32>
      %c0_148 = arith.constant 0 : index
      %c0_149 = arith.constant 0 : index
      %207 = vector.load %arg6[%c0_148, %c0_149] : memref<1x32xf32, #tpu.memory_space<vmem>>, vector<1x32xf32>
      %208 = vector.broadcast %207 : vector<1x32xf32> to vector<8x32xf32>
      %209 = arith.addf %206, %208 : vector<8x32xf32>
      %c0_150 = arith.constant 0 : index
      %c0_151 = arith.constant 0 : index
      %c0_152 = arith.constant 0 : index
      %210 = vector.load %arg7[%c0_150, %c0_151, %c0_152] : memref<1x8x32xf32, #tpu.memory_space<vmem>>, vector<1x8x32xf32>
      %211 = vector.shape_cast %210 : vector<1x8x32xf32> to vector<8x32xf32>
      %212 = vector.shape_cast %209 : vector<8x32xf32> to vector<1x8x32xf32>
      tpu.vector_store %arg7[%c0_150, %c0_151, %c0_152], %212 {strides = array<i32>} : memref<1x8x32xf32, #tpu.memory_space<vmem>>, vector<1x8x32xf32>,
    } else {
    }
    return
  }
  func.func @transform_0(%arg0: i32, %arg1: i32, %arg2: i32) -> (i32, i32, i32) {
    %c0_i32 = arith.constant 0 : i32
    %c0_i32_0 = arith.constant 0 : i32
    return %arg0, %arg1, %c0_i32 : i32, i32, i32
  }
  func.func @transform_1(%arg0: i32, %arg1: i32, %arg2: i32) -> (i32, i32, i32) {
    %c0_i32 = arith.constant 0 : i32
    %c0_i32_0 = arith.constant 0 : i32
    return %arg0, %arg2, %c0_i32 : i32, i32, i32
  }
  func.func @transform_2(%arg0: i32, %arg1: i32, %arg2: i32) -> (i32, i32) {
    %c0_i32 = arith.constant 0 : i32
    %c0_i32_0 = arith.constant 0 : i32
    %c0_i32_1 = arith.constant 0 : i32
    return %c0_i32, %c0_i32_0 : i32, i32
  }
  func.func @transform_3(%arg0: i32, %arg1: i32, %arg2: i32) -> (i32, i32) {
    %c0_i32 = arith.constant 0 : i32
    %c0_i32_0 = arith.constant 0 : i32
    %c0_i32_1 = arith.constant 0 : i32
    return %c0_i32, %c0_i32_0 : i32, i32
  }
  func.func @transform_4(%arg0: i32, %arg1: i32, %arg2: i32) -> (i32, i32, i32) {
    %c0_i32 = arith.constant 0 : i32
    %c0_i32_0 = arith.constant 0 : i32
    return %arg0, %arg1, %c0_i32 : i32, i32, i32
  }
}

</mosaic_0001>

<llo_original>
// kernel: multi_head_attention.2
$region0: #{multi_head_attention.2}
  #allocation0 [shape = 'u32[]', space=smem, size = 0x4, offset = 0x4, fixed_abs, tag = 'smem constant byte address 0x4 - core index']
  #allocation1 [shape = 'u32[72,128]{1,0:T(1,128)}', space=vmem, size = 0x9000, scoped, tag = 'internal scratch']
  #allocation2 [shape = 'f32[16,96]{1,0:T(8,128)}', space=vmem, size = 0x2000, scoped, tag = 'scratch operand']
  %s0 = inlined_call_operand.hbm [shape: f32[16,32], index: 0, kind: input, shape index: {}]
  %s1 = inlined_call_operand.hbm [shape: bf16[32,96], index: 1, kind: input, shape index: {}]
  %s2 = inlined_call_operand.vmem [shape: f32[1,96], index: 2, kind: input, shape index: {}]
  %s3 = inlined_call_operand.vmem [shape: bf16[16,96], index: 3, kind: output, shape index: {}]
  %s4 = sld [smem:[#allocation0]]
  $region38: #{multi_head_attention.2} parent=0
    _
  %s6 = ssub.s32 1, %s4
  %s7 = scalar_select 0, %s6, %s4
  $region1: #{multi_head_attention.2} parent=0
    #allocation3 [shape = 'u8[8192]{0}', space=vmem, size = 0x2000, scoped, tag = 'input window, operand 0, single buffered']
    #allocation4 [shape = 's32[1]{0}', space=sflag, size = 0x4, scoped, tag = 'scoped memory for multi_head_attention.2']
    #allocation5 [shape = 'u8[8192]{0}', space=vmem, size = 0x2000, scoped, tag = 'input window, operand 1, single buffered']
    #allocation6 [shape = 's32[1]{0}', space=sflag, size = 0x4, scoped, tag = 'scoped memory for multi_head_attention.2']
    %8 = vsyncpa [#allocation4], 0
    %9 = vsyncpa [#allocation6], 0
    // Predicated region
    $region2: #{multi_head_attention.2} parent=1 // pred_check
      _
    $region3: #{multi_head_attention.2} parent=1 // pred_check_branch
      %11 = sbr.rel (0) target = $region5
    $region4: #{multi_head_attention.2} parent=1 // pred_region
      %13 = vsyncadd [#allocation4], 0
      %s14 = sshll.u32 %s0, 4
      %s15 = int_to_ptr.hbm [resolvable:$true] %s14
      %s16 = sshll.u32 [#allocation3], 4
      %s17 = int_to_ptr.vmem [resolvable:$true] %s16
      %22 = dma.hbm_to_vmem [thread:$0]  %s15, 256, %s17, [#allocation4], 128, 128, 8
    $region5: #{multi_head_attention.2} parent=1 // pred_fallthru
      _
    // Predicated region
    $region6: #{multi_head_attention.2} parent=1 // pred_check
      _
    $region7: #{multi_head_attention.2} parent=1 // pred_check_branch
      %24 = sbr.rel (0) target = $region9
    $region8: #{multi_head_attention.2} parent=1 // pred_region
      %26 = vsyncadd [#allocation6], 0
      %s27 = sshll.u32 %s1, 4
      %s28 = int_to_ptr.hbm [resolvable:$true] %s27
      %s29 = sshll.u32 [#allocation5], 4
      %s30 = int_to_ptr.vmem [resolvable:$true] %s29
      %35 = dma.hbm_to_vmem [thread:$0]  %s28, 256, %s30, [#allocation6], 64, 64, 4
    $region9: #{multi_head_attention.2} parent=1 // pred_fallthru
      _
    // Predicated region
    $region10: #{multi_head_attention.2} parent=1 // pred_check
      _
    $region11: #{multi_head_attention.2} parent=1 // pred_check_branch
      %37 = sbr.rel (0) target = $region13
    $region12: #{multi_head_attention.2} parent=1 // pred_region
      _
    $region13: #{multi_head_attention.2} parent=1 // pred_fallthru
      _
    // Predicated region
    $region14: #{multi_head_attention.2} parent=1 // pred_check
      _
    $region15: #{multi_head_attention.2} parent=1 // pred_check_branch
      %39 = sbr.rel (0) target = $region17
    $region16: #{multi_head_attention.2} parent=1 // pred_region
      %41 = dma.done [#allocation4], 256
    $region17: #{multi_head_attention.2} parent=1 // pred_fallthru
      _
    // Predicated region
    $region18: #{multi_head_attention.2} parent=1 // pred_check
      _
    $region19: #{multi_head_attention.2} parent=1 // pred_check_branch
      %43 = sbr.rel (0) target = $region21
    $region20: #{multi_head_attention.2} parent=1 // pred_region
      %45 = dma.done [#allocation6], 256
    $region21: #{multi_head_attention.2} parent=1 // pred_fallthru
      _
    %p47 = scmp.eq.s32.totalorder 0, 0
    // Predicated region
    $region22: #{multi_head_attention.2} parent=1 // pred_check
      %p48 = pneg %p47
    $region23: #{multi_head_attention.2} parent=1 // pred_check_branch
      %50 = sbr.rel (%p48) target = $region25
    $region24: #{multi_head_attention.2} parent=1 // pred_region
      %vm51 = vcmask 785408
      %52 = vst.msk [vmem:[#allocation2] sm:$0xff] %vm51, 0.0
      %53 = vst.msk [vmem:[#allocation2 + $0x8] sm:$0xff] %vm51, 0.0
    $region25: #{multi_head_attention.2} parent=1 // pred_fallthru
      _
    %v54 = vld [vmem:[#allocation2] sm:$0xff]
    %v55 = vld [vmem:[#allocation2 + $0x8] sm:$0xff]
    %v56 = vld [vmem:[#allocation3] sm:$0xff]
    %v57 = vld [vmem:[#allocation3 + $0x8] sm:$0xff]
    %v58 = vpack.c.bf16 %v57, %v56
    %v59 = vld [vmem:[#allocation5] sm:$0xf]
    %v60 = vld [vmem:[#allocation5 + $0x4] sm:$0xf]
    %v61 = vld [vmem:[#allocation5 + $0x8] sm:$0xf]
    %v62 = vld [vmem:[#allocation5 + $0xc] sm:$0xf]
    %v67 = vunpack.c.l.b16 %v59
    %v68 = vunpack.c.l.b16 %v60
    %v69 = vunpack.c.l.b16 %v61
    %v70 = vunpack.c.l.b16 %v62
    %v71 = vpack.c.b16 %v68, %v67
    %v72 = vpack.c.b16 %v70, %v69
    %vm75 = vcmask 261120
    %v77 = vsel %vm75, %v58, 0
    %79 = vmatpush.bf16.msra.mxu0 0
    %80 = vmatpush.bf16.msra.mxu0 0
    %81 = vmatpush.bf16.msra.mxu0 0
    %82 = vmatpush.bf16.msra.mxu0 0
    %83 = vmatpush.bf16.msra.mxu0 0
    %84 = vmatpush.bf16.msra.mxu0 0
    %85 = vmatpush.bf16.msra.mxu0 %v72
    %86 = vmatpush.bf16.msra.mxu0 %v71
    %87 = vmatmul.bf16.gmra.mxu0 %v77
    %v88 = vpop.f32.mrf.mxu0
    %v89 = vadd.f32 0.0, %v88
    %v90 = vpop.f32.mrf.mxu0
    %v91 = vadd.f32 0.0, %v90
    %92 = vdwg.mxu0
    %v93 = vadd.f32 %v54, %v89
    %v94 = vadd.f32 %v55, %v91
    %vm95 = vcmask 785408
    %96 = vst.msk [vmem:[#allocation2] sm:$0xff] %vm95, %v93
    %97 = vst.msk [vmem:[#allocation2 + $0x8] sm:$0xff] %vm95, %v94
    // Predicated region
    $region26: #{multi_head_attention.2} parent=1 // pred_check
      %p98 = pneg %p47
    $region27: #{multi_head_attention.2} parent=1 // pred_check_branch
      %100 = sbr.rel (%p98) target = $region29
    $region28: #{multi_head_attention.2} parent=1 // pred_region
      %v101 = vld [vmem:[#allocation2] sm:$0xff]
      %v102 = vld [vmem:[#allocation2 + $0x8] sm:$0xff]
      %v103 = vld [vmem:[%s2] sm:$0x1]
      %v105 = vperm.slane %v103, 0
      %v107 = vadd.f32 %v101, %v105
      %v108 = vadd.f32 %v102, %v105
      %v109 = vpack.c.bf16 %v107, %v107
      %v110 = vpack.c.bf16 %v108, %v108
      %vm111 = vcmask 781312
      %112 = vst.msk [vmem:[%s3] sm:$0xf] %vm111, %v109
      %113 = vst.msk [vmem:[%s3 + $0x4] sm:$0xf] %vm111, %v110
    $region29: #{multi_head_attention.2} parent=1 // pred_fallthru
      _
    // Predicated region
    $region30: #{multi_head_attention.2} parent=1 // pred_check
      _
    $region31: #{multi_head_attention.2} parent=1 // pred_check_branch
      %115 = sbr.rel (0) target = $region33
    $region32: #{multi_head_attention.2} parent=1 // pred_region
      _
    $region33: #{multi_head_attention.2} parent=1 // pred_fallthru
      _
    // Predicated region
    $region34: #{multi_head_attention.2} parent=1 // pred_check
      _
    $region35: #{multi_head_attention.2} parent=1 // pred_check_branch
      %117 = sbr.rel (0) target = $region37
    $region36: #{multi_head_attention.2} parent=1 // pred_region
      _
    $region37: #{multi_head_attention.2} parent=1 // pred_fallthru
      _
    %118 = vsyncpa [#allocation4], 1
    %119 = vsyncpa [#allocation6], 1

// kernel: multi_head_attention.3
$region0: #{multi_head_attention.3}
  #allocation0 [shape = 'u32[]', space=smem, size = 0x4, offset = 0x4, fixed_abs, tag = 'smem constant byte address 0x4 - core index']
  #allocation1 [shape = 'u32[72,128]{1,0:T(1,128)}', space=vmem, size = 0x9000, scoped, tag = 'internal scratch']
  #allocation2 [shape = 'f32[4,8,1]{2,1,0:T(8,128)}', space=vmem, size = 0x4000, scoped, tag = 'scratch operand']
  #allocation3 [shape = 'f32[4,8,1]{2,1,0:T(8,128)}', space=vmem, size = 0x4000, scoped, tag = 'scratch operand']
  #allocation4 [shape = 'f32[4,8,8]{2,1,0:T(8,128)}', space=vmem, size = 0x4000, scoped, tag = 'scratch operand']
  %s0 = inlined_call_operand.vmem [shape: bf16[2,8,96], index: 0, kind: input, shape index: {}, may-alias: {0,1}]
  %s1 = inlined_call_operand.vmem [shape: bf16[2,8,96], index: 1, kind: input, shape index: {}, may-alias: {0,1}]
  %s2 = inlined_call_operand.hbm [shape: bf16[32,32], index: 2, kind: input, shape index: {}]
  %s3 = inlined_call_operand.vmem [shape: f32[1,32], index: 3, kind: input, shape index: {}]
  %s4 = inlined_call_operand.hbm [shape: f32[2,8,32], index: 4, kind: output, shape index: {}]
  %s5 = sld [smem:[#allocation0]]
  $region61: #{multi_head_attention.3} parent=0
    _
  %s7 = ssub.s32 1, %s5
  %s8 = scalar_select 0, %s7, %s5
  $region1: #{multi_head_attention.3} parent=0
    #allocation5 [shape = 'u8[8192]{0}', space=vmem, size = 0x2000, scoped, tag = 'input window, operand 2, single buffered']
    #allocation6 [shape = 's32[2]{0}', space=sflag, size = 0x8, scoped, tag = 'scoped memory for multi_head_attention.3']
    #allocation7 [shape = 's32[2]{0}', space=sflag, size = 0x8, scoped, tag = 'scoped memory for multi_head_attention.3']
    #allocation8 [shape = 'u8[8192]{0}', space=vmem, size = 0x2000, scoped, tag = 'output window, operand 0']
    %9 = vsyncpa [#allocation6], 0
    %10 = vsyncpa [#allocation7], 0
    %s11 = scalar_lea.sflag [#allocation7], 1
    %12 = vsyncpa %s11, 0
    loop: start=0, step=1, limit=4
    $region2: #{multi_head_attention.3} parent=1 // loop_pre_header
      _
    $region3: #{multi_head_attention.3} parent=1 // loop_header
      %s14 = sphi 0, %s18
      %p15 = scmp.ge.s32.totalorder %s14, 4
      %s21 = sphi 0, %s40
      %s22 = sphi 0, %s36
      %s23 = sphi 0, %s32
      %s24 = sphi 0, %s21
      %s25 = sphi 0, %s22
      %s26 = sphi 0, %s23
      %s27 = sphi 0, %s24
      %s28 = sphi 0, %s25
      %s29 = sphi 0, %s26
      %s45 = sphi 0, %s47
      %s48 = sphi 0, %s45
      %s49 = sphi 0, %s48
      %s65 = sphi 0, %s49
      %s73 = sphi 0, %s75
      %s76 = sphi 0, %s73
      %s77 = sphi 0, %s76
      %s93 = sphi 0, %s77
      %s97 = sphi 0, %s97
      %s99 = sphi 0, %s97
      %s100 = sphi 0, %s99
      %s114 = sphi 0, %s100
      %s118 = sphi 0, %s118
      %s120 = sphi 0, %s118
      %s121 = sphi 0, %s120
      %s135 = sphi 0, %s121
      %s143 = sphi 0, %s145
      %s146 = sphi 0, %s143
      %s147 = sphi 0, %s146
      %s163 = sphi 0, %s147
    $region4: #{multi_head_attention.3} parent=1 // loop_header_branch
      %17 = sbr.rel (%p15) target = $region8
    $region5: #{multi_head_attention.3} parent=1 // loop_body
      %s19 = ssub.s32 %s14, 1
      %s20 = ssub.s32 %s14, 2
      %s30 = sadd.s32 1, %s23
      %p31 = scmp.ge.s32.totalorder %s30, 1
      %s32 = scalar_select %p31, 0, %s30
      %s33 = sadd.s32 1, %s22
      %s34 = scalar_select %p31, %s33, %s22
      %p35 = scmp.ge.s32.totalorder %s34, 1
      %s36 = scalar_select %p35, 0, %s34
      %s37 = sadd.s32 1, %s21
      %s38 = scalar_select %p35, %s37, %s21
      %p39 = scmp.ge.s32.totalorder %s38, 2
      %s40 = scalar_select %p39, 0, %s38
      %s41 = ssub.s32 %s21, %s40
      %s42 = ssub.s32 %s22, %s36
      %s43 = sor.u32 %s41, %s42
      %p44 = scmp.eq.s32.totalorder %s43, 0
      %s46 = sadd.s32 %s45, 1
      %s47 = scalar_select %p44, %s45, %s46
      %p50 = pneg %p44
      %p51 = scmp.eq.s32.totalorder %s14, 1
      %p52 = por %p50, %p51
      %p53 = scmp.ne.s32.totalorder %s45, %s48
      %p54 = scmp.eq.s32.totalorder %s14, 0
      %p55 = por %p53, %p54
      %p56 = scmp.ne.s32.totalorder %s45, %s48
      %p57 = scmp.eq.s32.totalorder %s19, 1
      %p58 = por %p56, %p57
      %p59 = scmp.ne.s32.totalorder %s48, %s49
      %p60 = scmp.eq.s32.totalorder %s19, 0
      %p61 = por %p59, %p60
      %p62 = scmp.ne.s32.totalorder %s48, %s49
      %p63 = scmp.eq.s32.totalorder %s20, 1
      %p64 = por %p62, %p63
      %p66 = scmp.ne.s32.totalorder %s49, %s65
      %p67 = scmp.eq.s32.totalorder %s20, 0
      %p68 = por %p66, %p67
      %s69 = ssub.s32 %s21, %s40
      %s70 = ssub.s32 %s23, %s32
      %s71 = sor.u32 %s69, %s70
      %p72 = scmp.eq.s32.totalorder %s71, 0
      %s74 = sadd.s32 %s73, 1
      %s75 = scalar_select %p72, %s73, %s74
      %p78 = pneg %p72
      %p79 = scmp.eq.s32.totalorder %s14, 1
      %p80 = por %p78, %p79
      %p81 = scmp.ne.s32.totalorder %s73, %s76
      %p82 = scmp.eq.s32.totalorder %s14, 0
      %p83 = por %p81, %p82
      %p84 = scmp.ne.s32.totalorder %s73, %s76
      %p85 = scmp.eq.s32.totalorder %s19, 1
      %p86 = por %p84, %p85
      %p87 = scmp.ne.s32.totalorder %s76, %s77
      %p88 = scmp.eq.s32.totalorder %s19, 0
      %p89 = por %p87, %p88
      %p90 = scmp.ne.s32.totalorder %s76, %s77
      %p91 = scmp.eq.s32.totalorder %s20, 1
      %p92 = por %p90, %p91
      %p94 = scmp.ne.s32.totalorder %s77, %s93
      %p95 = scmp.eq.s32.totalorder %s20, 0
      %p96 = por %p94, %p95
      %s98 = sadd.s32 %s97, 1
      %p101 = scmp.eq.s32.totalorder %s14, 1
      %p102 = scmp.ne.s32.totalorder %s97, %s99
      %p103 = scmp.eq.s32.totalorder %s14, 0
      %p104 = por %p102, %p103
      %p105 = scmp.ne.s32.totalorder %s97, %s99
      %p106 = scmp.eq.s32.totalorder %s19, 1
      %p107 = por %p105, %p106
      %p108 = scmp.ne.s32.totalorder %s99, %s100
      %p109 = scmp.eq.s32.totalorder %s19, 0
      %p110 = por %p108, %p109
      %p111 = scmp.ne.s32.totalorder %s99, %s100
      %p112 = scmp.eq.s32.totalorder %s20, 1
      %p113 = por %p111, %p112
      %p115 = scmp.ne.s32.totalorder %s100, %s114
      %p116 = scmp.eq.s32.totalorder %s20, 0
      %p117 = por %p115, %p116
      %s119 = sadd.s32 %s118, 1
      %p122 = scmp.eq.s32.totalorder %s14, 1
      %p123 = scmp.ne.s32.totalorder %s118, %s120
      %p124 = scmp.eq.s32.totalorder %s14, 0
      %p125 = por %p123, %p124
      %p126 = scmp.ne.s32.totalorder %s118, %s120
      %p127 = scmp.eq.s32.totalorder %s19, 1
      %p128 = por %p126, %p127
      %p129 = scmp.ne.s32.totalorder %s120, %s121
      %p130 = scmp.eq.s32.totalorder %s19, 0
      %p131 = por %p129, %p130
      %p132 = scmp.ne.s32.totalorder %s120, %s121
      %p133 = scmp.eq.s32.totalorder %s20, 1
      %p134 = por %p132, %p133
      %p136 = scmp.ne.s32.totalorder %s121, %s135
      %p137 = scmp.eq.s32.totalorder %s20, 0
      %p138 = por %p136, %p137
      %s139 = ssub.s32 %s21, %s40
      %s140 = ssub.s32 %s22, %s36
      %s141 = sor.u32 %s139, %s140
      %p142 = scmp.eq.s32.totalorder %s141, 0
      %s144 = sadd.s32 %s143, 1
      %s145 = scalar_select %p142, %s143, %s144
      %p148 = pneg %p142
      %p149 = scmp.eq.s32.totalorder %s14, 1
      %p150 = por %p148, %p149
      %p151 = scmp.ne.s32.totalorder %s143, %s146
      %p152 = scmp.eq.s32.totalorder %s14, 0
      %p153 = por %p151, %p152
      %p154 = scmp.ne.s32.totalorder %s143, %s146
      %p155 = scmp.eq.s32.totalorder %s19, 1
      %p156 = por %p154, %p155
      %p157 = scmp.ne.s32.totalorder %s146, %s147
      %p158 = scmp.eq.s32.totalorder %s19, 0
      %p159 = por %p157, %p158
      %p160 = scmp.ne.s32.totalorder %s146, %s147
      %p161 = scmp.eq.s32.totalorder %s20, 1
      %p162 = por %p160, %p161
      %p164 = scmp.ne.s32.totalorder %s147, %s163
      %p165 = scmp.eq.s32.totalorder %s20, 0
      %p166 = por %p164, %p165
      %p167 = scmp.le.s32.totalorder 1, %s14
      %p168 = scmp.lt.s32.totalorder %s14, 3
      %p169 = pnand %p167, %p168
      %p170 = pneg %p169
      // Predicated region
      $region9: #{multi_head_attention.3} parent=5 // pred_check
        _
      $region10: #{multi_head_attention.3} parent=5 // pred_check_branch
        %172 = sbr.rel (%p169) target = $region12
      $region11: #{multi_head_attention.3} parent=5 // pred_region
        %s173 = ssub.s32 %s14, 1
        // Predicated region
        $region13: #{multi_head_attention.3} parent=11 // pred_check
          %p174 = pneg %p110
        $region14: #{multi_head_attention.3} parent=11 // pred_check_branch
          %176 = sbr.rel (%p174) target = $region16
        $region15: #{multi_head_attention.3} parent=11 // pred_region
          %178 = vsyncadd [#allocation6], 0
          %s179 = sshll.u32 %s2, 4
          %s180 = int_to_ptr.hbm [resolvable:$true] %s179
          %s181 = sshll.u32 [#allocation5], 4
          %s182 = int_to_ptr.vmem [resolvable:$true] %s181
          %187 = dma.hbm_to_vmem [thread:$0]  %s180, 256, %s182, [#allocation6], 64, 64, 4
        $region16: #{multi_head_attention.3} parent=11 // pred_fallthru
          _
        // Predicated region
        $region17: #{multi_head_attention.3} parent=11 // pred_check
          %p188 = pneg %p131
        $region18: #{multi_head_attention.3} parent=11 // pred_check_branch
          %190 = sbr.rel (%p188) target = $region20
        $region19: #{multi_head_attention.3} parent=11 // pred_region
          _
        $region20: #{multi_head_attention.3} parent=11 // pred_fallthru
          _
      $region12: #{multi_head_attention.3} parent=5 // pred_fallthru
        _
      %p191 = scmp.lt.s32.totalorder %s14, 2
      // Predicated region
      $region21: #{multi_head_attention.3} parent=5 // pred_check
        %p192 = pneg %p191
      $region22: #{multi_head_attention.3} parent=5 // pred_check_branch
        %194 = sbr.rel (%p192) target = $region24
      $region23: #{multi_head_attention.3} parent=5 // pred_region
        // Predicated region
        $region25: #{multi_head_attention.3} parent=23 // pred_check
          %p195 = pneg %p55
        $region26: #{multi_head_attention.3} parent=23 // pred_check_branch
          %197 = sbr.rel (%p195) target = $region28
        $region27: #{multi_head_attention.3} parent=23 // pred_region
          %p198 = scmp.lt.s32.totalorder %s21, 1
          %s199 = scalar_select %p198, %s21, 1
          %p200 = scmp.lt.s32.totalorder %s22, 0
          %s201 = scalar_select %p200, %s22, 0
          %s202 = sadd.s32 %s201, %s199
          %s203 = smul.addr %s202, 4
          %s204 = scalar_lea.vmem %s0, %s203
        $region28: #{multi_head_attention.3} parent=23 // pred_fallthru
          _
        // Predicated region
        $region29: #{multi_head_attention.3} parent=23 // pred_check
          %p205 = pneg %p83
        $region30: #{multi_head_attention.3} parent=23 // pred_check_branch
          %207 = sbr.rel (%p205) target = $region32
        $region31: #{multi_head_attention.3} parent=23 // pred_region
          %p208 = scmp.lt.s32.totalorder %s21, 1
          %s209 = scalar_select %p208, %s21, 1
          %p210 = scmp.lt.s32.totalorder %s23, 0
          %s211 = scalar_select %p210, %s23, 0
          %s212 = sadd.s32 %s211, %s209
          %s213 = smul.addr %s212, 4
          %s214 = scalar_lea.vmem %s1, %s213
        $region32: #{multi_head_attention.3} parent=23 // pred_fallthru
          _
      $region24: #{multi_head_attention.3} parent=5 // pred_fallthru
        _
      %p215 = scmp.le.s32.totalorder 1, %s14
      %p216 = scmp.lt.s32.totalorder %s14, 3
      %p217 = pnand %p215, %p216
      %p218 = pneg %p217
      // Predicated region
      $region33: #{multi_head_attention.3} parent=5 // pred_check
        _
      $region34: #{multi_head_attention.3} parent=5 // pred_check_branch
        %220 = sbr.rel (%p217) target = $region36
      $region35: #{multi_head_attention.3} parent=5 // pred_region
        %s221 = ssub.s32 %s14, 1
        // Predicated region
        $region37: #{multi_head_attention.3} parent=35 // pred_check
          %p222 = pneg %p110
        $region38: #{multi_head_attention.3} parent=35 // pred_check_branch
          %224 = sbr.rel (%p222) target = $region40
        $region39: #{multi_head_attention.3} parent=35 // pred_region
          %226 = dma.done [#allocation6], 256
        $region40: #{multi_head_attention.3} parent=35 // pred_fallthru
          _
        %p227 = scmp.lt.s32.totalorder %s24, 1
        %s228 = scalar_select %p227, %s24, 1
        %p229 = scmp.lt.s32.totalorder %s25, 0
        %s230 = scalar_select %p229, %s25, 0
        %s231 = sadd.s32 %s230, %s228
        %s232 = smul.addr %s231, 4
        %s233 = scalar_lea.vmem %s0, %s232
        %p234 = pneg %p61
        %p235 = pneg %p58
        %p236 = scmp.lt.s32.totalorder %s24, 1
        %s237 = scalar_select %p236, %s24, 1
        %p238 = scmp.lt.s32.totalorder %s26, 0
        %s239 = scalar_select %p238, %s26, 0
        %s240 = sadd.s32 %s239, %s237
        %s241 = smul.addr %s240, 4
        %s242 = scalar_lea.vmem %s1, %s241
        %p243 = pneg %p89
        %p244 = pneg %p86
        %p245 = pneg %p110
        %p246 = pneg %p107
        %p247 = pneg %p131
        %p248 = pneg %p128
        %p249 = pneg %p159
        %p250 = pneg %p156
        %s251 = sand.u32 %s146, 1
        %s252 = scalar_lea.sflag [#allocation7], %s251
        %s253 = sand.u32 %s146, 1
        %s254 = smul.addr %s253, 8
        %s255 = scalar_lea.vmem [#allocation8], %s254
        %p256 = scmp.lt.s32.totalorder %s24, 1
        %s257 = scalar_select %p256, %s24, 1
        %p258 = scmp.lt.s32.totalorder %s25, 0
        %s259 = scalar_select %p258, %s25, 0
        %s260 = sadd.s32 %s259, %s257
        %s261 = smul.addr %s260, 4
        %s262 = scalar_lea.vmem %s0, %s261
        %p263 = scmp.lt.s32.totalorder %s24, 1
        %s264 = scalar_select %p263, %s24, 1
        %p265 = scmp.lt.s32.totalorder %s26, 0
        %s266 = scalar_select %p265, %s26, 0
        %s267 = sadd.s32 %s266, %s264
        %s268 = smul.addr %s267, 4
        %s269 = scalar_lea.vmem %s1, %s268
        %p271 = scmp.eq.s32.totalorder %s26, 0
        // Predicated region
        $region41: #{multi_head_attention.3} parent=35 // pred_check
          %p272 = pneg %p271
        $region42: #{multi_head_attention.3} parent=35 // pred_check_branch
          %274 = sbr.rel (%p272) target = $region44
        $region43: #{multi_head_attention.3} parent=35 // pred_region
          %vm275 = vcmask 7168
          %276 = vst.msk [vmem:[#allocation2] sm:$0xff] %vm275, -inf
          %277 = vst.msk [vmem:[#allocation2 + $0x8] sm:$0xff] %vm275, -inf
          %278 = vst.msk [vmem:[#allocation2 + $0x10] sm:$0xff] %vm275, -inf
          %279 = vst.msk [vmem:[#allocation2 + $0x18] sm:$0xff] %vm275, -inf
          %280 = vst.msk [vmem:[#allocation3] sm:$0xff] %vm275, 0.0
          %281 = vst.msk [vmem:[#allocation3 + $0x8] sm:$0xff] %vm275, 0.0
          %282 = vst.msk [vmem:[#allocation3 + $0x10] sm:$0xff] %vm275, 0.0
          %283 = vst.msk [vmem:[#allocation3 + $0x18] sm:$0xff] %vm275, 0.0
          %vm284 = vcmask 64512
          %285 = vst.msk [vmem:[#allocation4] sm:$0xff] %vm284, 0.0
          %286 = vst.msk [vmem:[#allocation4 + $0x8] sm:$0xff] %vm284, 0.0
          %287 = vst.msk [vmem:[#allocation4 + $0x10] sm:$0xff] %vm284, 0.0
          %288 = vst.msk [vmem:[#allocation4 + $0x18] sm:$0xff] %vm284, 0.0
        $region44: #{multi_head_attention.3} parent=35 // pred_fallthru
          _
        %v289 = vld [vmem:[%s262] sm:$0xf]
        %v290 = vld [vmem:[%s269] sm:$0xf]
        %v292 = vunpack.c.l.b16 %v290
        %v293 = vpack.c.b16 %v292, %v292
        %294 = vrot.lane.b32.xlu0 %v293, 96
        %v295 = vpop.permute.xlu0 %294
        %vm296 = vcmask 64512
        %v298 = vsel %vm296, %v289, 0
        %v301 = vsel %vm296, %v295, 0
        %303 = vmatpush.bf16.xpose.msra.mxu0 0
        %304 = vmatpush.bf16.xpose.msra.mxu0 0
        %305 = vmatpush.bf16.xpose.msra.mxu0 0
        %306 = vmatpush.bf16.xpose.msra.mxu0 0
        %307 = vmatpush.bf16.xpose.msra.mxu0 0
        %308 = vmatpush.bf16.xpose.msra.mxu0 0
        %309 = vmatpush.bf16.xpose.msra.mxu0 0
        %310 = vmatpush.bf16.xpose.msra.mxu0 %v301
        %311 = vmatmul.bf16.gmra.mxu0 %v298
        %v312 = vpop.f32.mrf.mxu0
        %v313 = vadd.f32 0.0, %v312
        %v314 = vpop.f32.mrf.mxu0
        %315 = vdwg.mxu0
        %v316 = vld [vmem:[#allocation2] sm:$0xff]
        %v317 = vsel %vm296, %v313, -inf
        %318 = vmax.xlane.f32.xlu0 %v317
        %v319 = vpop.xlane.xlu0 %318
        %v320 = vmax.f32 %v316, %v319
        %v321 = vsub.f32 %v316, %v320
        %v322 = vmul.f32 %v321, 1.442695
        %v323 = vpow.pop %v322
        %325 = vset.pattern.permute.xlu0 0
        %326 = vperm.xlu0 %325, %v320
        %v327 = vpop.permute.xlu0 %326
        %v329 = vsub.f32 %v313, %v327
        %v330 = vmul.f32 %v329, 1.442695
        %v331 = vpow.pop %v330
        %v332 = vld [vmem:[#allocation3] sm:$0xff]
        %v333 = vmul.f32 %v323, %v332
        %v334 = vsel %vm296, %v331, 0.0
        %335 = vadd.xlane.f32.xlu0 %v334
        %v336 = vpop.xlane.xlu0 %335
        %v337 = vadd.f32 %v333, %v336
        %vm338 = vcmask 7168
        %339 = vst.msk [vmem:[#allocation3] sm:$0xff] %vm338, %v337
        %v340 = vld [vmem:[#allocation4] sm:$0xff]
        %342 = vset.pattern.permute.xlu0 0
        %343 = vperm.xlu0 %342, %v323
        %v344 = vpop.permute.xlu0 %343
        %v346 = vmul.f32 %v344, %v340
        %v347 = vpack.c.bf16 %v331, %v331
        %348 = vrot.lane.b32.xlu0 %v293, 64
        %v349 = vpop.permute.xlu0 %348
        %v351 = vsel %vm296, %v347, 0
        %vm353 = vcmask 1043456
        %v355 = vsel %vm353, %v349, 0
        %357 = vmatpush.bf16.msra.mxu0 0
        %358 = vmatpush.bf16.msra.mxu0 0
        %359 = vmatpush.bf16.msra.mxu0 0
        %360 = vmatpush.bf16.msra.mxu0 0
        %361 = vmatpush.bf16.msra.mxu0 0
        %362 = vmatpush.bf16.msra.mxu0 0
        %363 = vmatpush.bf16.msra.mxu0 0
        %364 = vmatpush.bf16.msra.mxu0 %v355
        %365 = vmatmul.bf16.gmra.mxu0 %v351
        %v366 = vpop.f32.mrf.mxu0
        %v367 = vadd.f32 0.0, %v366
        %v368 = vpop.f32.mrf.mxu0
        %369 = vdwg.mxu0
        %v370 = vadd.f32 %v346, %v367
        %371 = vst.msk [vmem:[#allocation4] sm:$0xff] %vm296, %v370
        %372 = vst.msk [vmem:[#allocation2] sm:$0xff] %vm338, %v320
        %v373 = vld [vmem:[%s262] sm:$0xf]
        %v374 = vld [vmem:[%s269] sm:$0xf]
        %v376 = vunpack.c.l.b16 %v373
        %v377 = vpack.c.b16 %v376, %v376
        %378 = vrot.lane.b32.xlu0 %v377, 120
        %v379 = vpop.permute.xlu0 %378
        %v381 = vunpack.c.l.b16 %v374
        %v382 = vpack.c.b16 %v381, %v381
        %383 = vrot.lane.b32.xlu0 %v382, 88
        %v384 = vpop.permute.xlu0 %383
        %v386 = vsel %vm296, %v379, 0
        %v389 = vsel %vm296, %v384, 0
        %391 = vmatpush.bf16.xpose.msra.mxu0 0
        %392 = vmatpush.bf16.xpose.msra.mxu0 0
        %393 = vmatpush.bf16.xpose.msra.mxu0 0
        %394 = vmatpush.bf16.xpose.msra.mxu0 0
        %395 = vmatpush.bf16.xpose.msra.mxu0 0
        %396 = vmatpush.bf16.xpose.msra.mxu0 0
        %397 = vmatpush.bf16.xpose.msra.mxu0 0
        %398 = vmatpush.bf16.xpose.msra.mxu0 %v389
        %399 = vmatmul.bf16.gmra.mxu0 %v386
        %v400 = vpop.f32.mrf.mxu0
        %v401 = vadd.f32 0.0, %v400
        %v402 = vpop.f32.mrf.mxu0
        %403 = vdwg.mxu0
        %s404 = scalar_lea.vmem [#allocation2], 8
        %v405 = vld [vmem:[%s404] sm:$0xff]
        %v406 = vsel %vm296, %v401, -inf
        %407 = vmax.xlane.f32.xlu0 %v406
        %v408 = vpop.xlane.xlu0 %407
        %v409 = vmax.f32 %v405, %v408
        %v410 = vsub.f32 %v405, %v409
        %v411 = vmul.f32 %v410, 1.442695
        %v412 = vpow.pop %v411
        %414 = vset.pattern.permute.xlu0 0
        %415 = vperm.xlu0 %414, %v409
        %v416 = vpop.permute.xlu0 %415
        %v418 = vsub.f32 %v401, %v416
        %v419 = vmul.f32 %v418, 1.442695
        %v420 = vpow.pop %v419
        %s421 = scalar_lea.vmem [#allocation3], 8
        %v422 = vld [vmem:[%s421] sm:$0xff]
        %v423 = vmul.f32 %v412, %v422
        %v424 = vsel %vm296, %v420, 0.0
        %425 = vadd.xlane.f32.xlu0 %v424
        %v426 = vpop.xlane.xlu0 %425
        %v427 = vadd.f32 %v423, %v426
        %428 = vst.msk [vmem:[%s421] sm:$0xff] %vm338, %v427
        %s429 = scalar_lea.vmem [#allocation4], 8
        %v430 = vld [vmem:[%s429] sm:$0xff]
        %432 = vset.pattern.permute.xlu0 0
        %433 = vperm.xlu0 %432, %v412
        %v434 = vpop.permute.xlu0 %433
        %v436 = vmul.f32 %v434, %v430
        %v437 = vpack.c.bf16 %v420, %v420
        %438 = vrot.lane.b32.xlu0 %v382, 56
        %v439 = vpop.permute.xlu0 %438
        %v441 = vsel %vm296, %v437, 0
        %v444 = vsel %vm353, %v439, 0
        %446 = vmatpush.bf16.msra.mxu0 0
        %447 = vmatpush.bf16.msra.mxu0 0
        %448 = vmatpush.bf16.msra.mxu0 0
        %449 = vmatpush.bf16.msra.mxu0 0
        %450 = vmatpush.bf16.msra.mxu0 0
        %451 = vmatpush.bf16.msra.mxu0 0
        %452 = vmatpush.bf16.msra.mxu0 0
        %453 = vmatpush.bf16.msra.mxu0 %v444
        %454 = vmatmul.bf16.gmra.mxu0 %v441
        %v455 = vpop.f32.mrf.mxu0
        %v456 = vadd.f32 0.0, %v455
        %v457 = vpop.f32.mrf.mxu0
        %458 = vdwg.mxu0
        %v459 = vadd.f32 %v436, %v456
        %460 = vst.msk [vmem:[%s429] sm:$0xff] %vm296, %v459
        %461 = vst.msk [vmem:[%s404] sm:$0xff] %vm338, %v409
        %v462 = vld [vmem:[%s262] sm:$0xf]
        %v463 = vld [vmem:[%s269] sm:$0xf]
        %v465 = vunpack.c.l.b16 %v462
        %v466 = vpack.c.b16 %v465, %v465
        %467 = vrot.lane.b32.xlu0 %v466, 112
        %v468 = vpop.permute.xlu0 %467
        %v470 = vunpack.c.l.b16 %v463
        %v471 = vpack.c.b16 %v470, %v470
        %472 = vrot.lane.b32.xlu0 %v471, 80
        %v473 = vpop.permute.xlu0 %472
        %v475 = vsel %vm296, %v468, 0
        %v478 = vsel %vm296, %v473, 0
        %480 = vmatpush.bf16.xpose.msra.mxu0 0
        %481 = vmatpush.bf16.xpose.msra.mxu0 0
        %482 = vmatpush.bf16.xpose.msra.mxu0 0
        %483 = vmatpush.bf16.xpose.msra.mxu0 0
        %484 = vmatpush.bf16.xpose.msra.mxu0 0
        %485 = vmatpush.bf16.xpose.msra.mxu0 0
        %486 = vmatpush.bf16.xpose.msra.mxu0 0
        %487 = vmatpush.bf16.xpose.msra.mxu0 %v478
        %488 = vmatmul.bf16.gmra.mxu0 %v475
        %v489 = vpop.f32.mrf.mxu0
        %v490 = vadd.f32 0.0, %v489
        %v491 = vpop.f32.mrf.mxu0
        %492 = vdwg.mxu0
        %s493 = scalar_lea.vmem [#allocation2], 16
        %v494 = vld [vmem:[%s493] sm:$0xff]
        %v495 = vsel %vm296, %v490, -inf
        %496 = vmax.xlane.f32.xlu0 %v495
        %v497 = vpop.xlane.xlu0 %496
        %v498 = vmax.f32 %v494, %v497
        %v499 = vsub.f32 %v494, %v498
        %v500 = vmul.f32 %v499, 1.442695
        %v501 = vpow.pop %v500
        %503 = vset.pattern.permute.xlu0 0
        %504 = vperm.xlu0 %503, %v498
        %v505 = vpop.permute.xlu0 %504
        %v507 = vsub.f32 %v490, %v505
        %v508 = vmul.f32 %v507, 1.442695
        %v509 = vpow.pop %v508
        %s510 = scalar_lea.vmem [#allocation3], 16
        %v511 = vld [vmem:[%s510] sm:$0xff]
        %v512 = vmul.f32 %v501, %v511
        %v513 = vsel %vm296, %v509, 0.0
        %514 = vadd.xlane.f32.xlu0 %v513
        %v515 = vpop.xlane.xlu0 %514
        %v516 = vadd.f32 %v512, %v515
        %517 = vst.msk [vmem:[%s510] sm:$0xff] %vm338, %v516
        %s518 = scalar_lea.vmem [#allocation4], 16
        %v519 = vld [vmem:[%s518] sm:$0xff]
        %521 = vset.pattern.permute.xlu0 0
        %522 = vperm.xlu0 %521, %v501
        %v523 = vpop.permute.xlu0 %522
        %v525 = vmul.f32 %v523, %v519
        %v526 = vpack.c.bf16 %v509, %v509
        %527 = vrot.lane.b32.xlu0 %v471, 48
        %v528 = vpop.permute.xlu0 %527
        %v530 = vsel %vm296, %v526, 0
        %v533 = vsel %vm353, %v528, 0
        %535 = vmatpush.bf16.msra.mxu0 0
        %536 = vmatpush.bf16.msra.mxu0 0
        %537 = vmatpush.bf16.msra.mxu0 0
        %538 = vmatpush.bf16.msra.mxu0 0
        %539 = vmatpush.bf16.msra.mxu0 0
        %540 = vmatpush.bf16.msra.mxu0 0
        %541 = vmatpush.bf16.msra.mxu0 0
        %542 = vmatpush.bf16.msra.mxu0 %v533
        %543 = vmatmul.bf16.gmra.mxu0 %v530
        %v544 = vpop.f32.mrf.mxu0
        %v545 = vadd.f32 0.0, %v544
        %v546 = vpop.f32.mrf.mxu0
        %547 = vdwg.mxu0
        %v548 = vadd.f32 %v525, %v545
        %549 = vst.msk [vmem:[%s518] sm:$0xff] %vm296, %v548
        %550 = vst.msk [vmem:[%s493] sm:$0xff] %vm338, %v498
        %v551 = vld [vmem:[%s262] sm:$0xf]
        %v552 = vld [vmem:[%s269] sm:$0xf]
        %v554 = vunpack.c.l.b16 %v551
        %v555 = vpack.c.b16 %v554, %v554
        %556 = vrot.lane.b32.xlu0 %v555, 104
        %v557 = vpop.permute.xlu0 %556
        %v559 = vunpack.c.l.b16 %v552
        %v560 = vpack.c.b16 %v559, %v559
        %561 = vrot.lane.b32.xlu0 %v560, 72
        %v562 = vpop.permute.xlu0 %561
        %v564 = vsel %vm296, %v557, 0
        %v567 = vsel %vm296, %v562, 0
        %569 = vmatpush.bf16.xpose.msra.mxu0 0
        %570 = vmatpush.bf16.xpose.msra.mxu0 0
        %571 = vmatpush.bf16.xpose.msra.mxu0 0
        %572 = vmatpush.bf16.xpose.msra.mxu0 0
        %573 = vmatpush.bf16.xpose.msra.mxu0 0
        %574 = vmatpush.bf16.xpose.msra.mxu0 0
        %575 = vmatpush.bf16.xpose.msra.mxu0 0
        %576 = vmatpush.bf16.xpose.msra.mxu0 %v567
        %577 = vmatmul.bf16.gmra.mxu0 %v564
        %v578 = vpop.f32.mrf.mxu0
        %v579 = vadd.f32 0.0, %v578
        %v580 = vpop.f32.mrf.mxu0
        %581 = vdwg.mxu0
        %s582 = scalar_lea.vmem [#allocation2], 24
        %v583 = vld [vmem:[%s582] sm:$0xff]
        %v584 = vsel %vm296, %v579, -inf
        %585 = vmax.xlane.f32.xlu0 %v584
        %v586 = vpop.xlane.xlu0 %585
        %v587 = vmax.f32 %v583, %v586
        %v588 = vsub.f32 %v583, %v587
        %v589 = vmul.f32 %v588, 1.442695
        %v590 = vpow.pop %v589
        %592 = vset.pattern.permute.xlu0 0
        %593 = vperm.xlu0 %592, %v587
        %v594 = vpop.permute.xlu0 %593
        %v596 = vsub.f32 %v579, %v594
        %v597 = vmul.f32 %v596, 1.442695
        %v598 = vpow.pop %v597
        %s599 = scalar_lea.vmem [#allocation3], 24
        %v600 = vld [vmem:[%s599] sm:$0xff]
        %v601 = vmul.f32 %v590, %v600
        %v602 = vsel %vm296, %v598, 0.0
        %603 = vadd.xlane.f32.xlu0 %v602
        %v604 = vpop.xlane.xlu0 %603
        %v605 = vadd.f32 %v601, %v604
        %606 = vst.msk [vmem:[%s599] sm:$0xff] %vm338, %v605
        %s607 = scalar_lea.vmem [#allocation4], 24
        %v608 = vld [vmem:[%s607] sm:$0xff]
        %610 = vset.pattern.permute.xlu0 0
        %611 = vperm.xlu0 %610, %v590
        %v612 = vpop.permute.xlu0 %611
        %v614 = vmul.f32 %v612, %v608
        %v615 = vpack.c.bf16 %v598, %v598
        %616 = vrot.lane.b32.xlu0 %v560, 40
        %v617 = vpop.permute.xlu0 %616
        %v619 = vsel %vm296, %v615, 0
        %v622 = vsel %vm353, %v617, 0
        %624 = vmatpush.bf16.msra.mxu0 0
        %625 = vmatpush.bf16.msra.mxu0 0
        %626 = vmatpush.bf16.msra.mxu0 0
        %627 = vmatpush.bf16.msra.mxu0 0
        %628 = vmatpush.bf16.msra.mxu0 0
        %629 = vmatpush.bf16.msra.mxu0 0
        %630 = vmatpush.bf16.msra.mxu0 0
        %631 = vmatpush.bf16.msra.mxu0 %v622
        %632 = vmatmul.bf16.gmra.mxu0 %v619
        %v633 = vpop.f32.mrf.mxu0
        %v634 = vadd.f32 0.0, %v633
        %v635 = vpop.f32.mrf.mxu0
        %636 = vdwg.mxu0
        %v637 = vadd.f32 %v614, %v634
        %638 = vst.msk [vmem:[%s607] sm:$0xff] %vm296, %v637
        %639 = vst.msk [vmem:[%s582] sm:$0xff] %vm338, %v587
        // Predicated region
        $region45: #{multi_head_attention.3} parent=35 // pred_check
          %p640 = pneg %p271
        $region46: #{multi_head_attention.3} parent=35 // pred_check_branch
          %642 = sbr.rel (%p640) target = $region48
        $region47: #{multi_head_attention.3} parent=35 // pred_region
          %v643 = vld [vmem:[#allocation4] sm:$0xff]
          %v644 = vld [vmem:[#allocation3] sm:$0xff]
          %v645 = vrcp.pop %v644
          %647 = vset.pattern.permute.xlu0 0
          %648 = vperm.xlu0 %647, %v645
          %v649 = vpop.permute.xlu0 %648
          %v651 = vmul.f32 %v643, %v649
          %v652 = vld [vmem:[#allocation5] sm:$0xf]
          %v653 = vpack.c.bf16 %v651, %v651
          %v654 = vld [vmem:[%s429] sm:$0xff]
          %v655 = vld [vmem:[%s421] sm:$0xff]
          %v656 = vrcp.pop %v655
          %658 = vset.pattern.permute.xlu0 0
          %659 = vperm.xlu0 %658, %v656
          %v660 = vpop.permute.xlu0 %659
          %v662 = vmul.f32 %v654, %v660
          %v663 = vld [vmem:[#allocation5 + $0x4] sm:$0xf]
          %v664 = vpack.c.bf16 %v662, %v662
          %v666 = vsel %vm296, %v664, 0
          %v669 = vsel %vm353, %v663, 0
          %671 = vmatpush.bf16.msra.mxu0 0
          %672 = vmatpush.bf16.msra.mxu0 0
          %673 = vmatpush.bf16.msra.mxu0 0
          %674 = vmatpush.bf16.msra.mxu0 0
          %675 = vmatpush.bf16.msra.mxu0 0
          %676 = vmatpush.bf16.msra.mxu0 0
          %677 = vmatpush.bf16.msra.mxu0 0
          %678 = vmatpush.bf16.msra.mxu0 %v669
          %679 = vmatmul.bf16.gmra.mxu0 %v666
          %v680 = vpop.f32.mrf.mxu0
          %v681 = vadd.f32 0.0, %v680
          %v682 = vpop.f32.mrf.mxu0
          %683 = vdwg.mxu0
          %v685 = vsel %vm296, %v653, 0
          %v688 = vsel %vm353, %v652, 0
          %690 = vmatpush.bf16.msra.mxu0 0
          %691 = vmatpush.bf16.msra.mxu0 0
          %692 = vmatpush.bf16.msra.mxu0 0
          %693 = vmatpush.bf16.msra.mxu0 0
          %694 = vmatpush.bf16.msra.mxu0 0
          %695 = vmatpush.bf16.msra.mxu0 0
          %696 = vmatpush.bf16.msra.mxu0 0
          %697 = vmatpush.bf16.msra.mxu0 %v688
          %698 = vmatmul.bf16.gmra.mxu0 %v685
          %v699 = vpop.f32.mrf.mxu0
          %v700 = vadd.f32 %v681, %v699
          %v701 = vpop.f32.mrf.mxu0
          %702 = vdwg.mxu0
          %v703 = vld [vmem:[%s518] sm:$0xff]
          %v704 = vld [vmem:[%s510] sm:$0xff]
          %v705 = vrcp.pop %v704
          %707 = vset.pattern.permute.xlu0 0
          %708 = vperm.xlu0 %707, %v705
          %v709 = vpop.permute.xlu0 %708
          %v711 = vmul.f32 %v703, %v709
          %v712 = vld [vmem:[#allocation5 + $0x8] sm:$0xf]
          %v713 = vpack.c.bf16 %v711, %v711
          %v715 = vsel %vm296, %v713, 0
          %v718 = vsel %vm353, %v712, 0
          %720 = vmatpush.bf16.msra.mxu0 0
          %721 = vmatpush.bf16.msra.mxu0 0
          %722 = vmatpush.bf16.msra.mxu0 0
          %723 = vmatpush.bf16.msra.mxu0 0
          %724 = vmatpush.bf16.msra.mxu0 0
          %725 = vmatpush.bf16.msra.mxu0 0
          %726 = vmatpush.bf16.msra.mxu0 0
          %727 = vmatpush.bf16.msra.mxu0 %v718
          %728 = vmatmul.bf16.gmra.mxu0 %v715
          %v729 = vpop.f32.mrf.mxu0
          %v730 = vadd.f32 0.0, %v729
          %v731 = vpop.f32.mrf.mxu0
          %732 = vdwg.mxu0
          %v733 = vadd.f32 %v700, %v730
          %v734 = vld [vmem:[%s607] sm:$0xff]
          %v735 = vld [vmem:[%s599] sm:$0xff]
          %v736 = vrcp.pop %v735
          %738 = vset.pattern.permute.xlu0 0
          %739 = vperm.xlu0 %738, %v736
          %v740 = vpop.permute.xlu0 %739
          %v742 = vmul.f32 %v734, %v740
          %v743 = vld [vmem:[#allocation5 + $0xc] sm:$0xf]
          %v744 = vpack.c.bf16 %v742, %v742
          %v746 = vsel %vm296, %v744, 0
          %v749 = vsel %vm353, %v743, 0
          %751 = vmatpush.bf16.msra.mxu0 0
          %752 = vmatpush.bf16.msra.mxu0 0
          %753 = vmatpush.bf16.msra.mxu0 0
          %754 = vmatpush.bf16.msra.mxu0 0
          %755 = vmatpush.bf16.msra.mxu0 0
          %756 = vmatpush.bf16.msra.mxu0 0
          %757 = vmatpush.bf16.msra.mxu0 0
          %758 = vmatpush.bf16.msra.mxu0 %v749
          %759 = vmatmul.bf16.gmra.mxu0 %v746
          %v760 = vpop.f32.mrf.mxu0
          %v761 = vadd.f32 0.0, %v760
          %v762 = vpop.f32.mrf.mxu0
          %763 = vdwg.mxu0
          %v764 = vadd.f32 %v733, %v761
          %v765 = vld [vmem:[%s3] sm:$0x1]
          %v767 = vperm.slane %v765, 0
          %v769 = vadd.f32 %v764, %v767
          %vm770 = vcmask 261120
          %771 = vst.msk [vmem:[%s255] sm:$0xff] %vm770, %v769
        $region48: #{multi_head_attention.3} parent=35 // pred_fallthru
          _
        %s772 = sand.u32 %s146, 1
        %s773 = scalar_lea.sflag [#allocation7], %s772
        %s774 = sand.u32 %s146, 1
        %s775 = smul.addr %s774, 8
        %s776 = scalar_lea.vmem [#allocation8], %s775
        // Predicated region
        $region49: #{multi_head_attention.3} parent=35 // pred_check
          %p777 = pneg %p156
        $region50: #{multi_head_attention.3} parent=35 // pred_check_branch
          %779 = sbr.rel (%p777) target = $region52
        $region51: #{multi_head_attention.3} parent=35 // pred_region
          %781 = vsyncadd %s773, 0
          %s782 = sadd.s32 %s25, %s24
          %s783 = smul.addr %s782, 8
          %s784 = scalar_lea.hbm %s4, %s783
          %s786 = sshll.u32 %s776, 4
          %s787 = int_to_ptr.vmem [resolvable:$true] %s786
          %s788 = sshll.u32 %s784, 4
          %s789 = int_to_ptr.hbm [resolvable:$true] %s788
          %791 = dma.vmem_to_hbm [thread:$0]  %s787, 128, %s789, %s773
        $region52: #{multi_head_attention.3} parent=35 // pred_fallthru
          _
      $region36: #{multi_head_attention.3} parent=5 // pred_fallthru
        _
      %p792 = scmp.le.s32.totalorder 2, %s14
      // Predicated region
      $region53: #{multi_head_attention.3} parent=5 // pred_check
        %p793 = pneg %p792
      $region54: #{multi_head_attention.3} parent=5 // pred_check_branch
        %795 = sbr.rel (%p793) target = $region56
      $region55: #{multi_head_attention.3} parent=5 // pred_region
        %s796 = ssub.s32 %s14, 2
        // Predicated region
        $region57: #{multi_head_attention.3} parent=55 // pred_check
          %p797 = pneg %p162
        $region58: #{multi_head_attention.3} parent=55 // pred_check_branch
          %799 = sbr.rel (%p797) target = $region60
        $region59: #{multi_head_attention.3} parent=55 // pred_region
          %s800 = sand.u32 %s147, 1
          %s801 = scalar_lea.sflag [#allocation7], %s800
          %s802 = sand.u32 %s147, 1
          %s803 = smul.addr %s802, 8
          %s804 = scalar_lea.vmem [#allocation8], %s803
          %806 = dma.done %s801, 128
        $region60: #{multi_head_attention.3} parent=55 // pred_fallthru
          _
      $region56: #{multi_head_attention.3} parent=5 // pred_fallthru
        _
    $region6: #{multi_head_attention.3} parent=1 // loop_footer
      %s18 = sadd.s32 1, %s14
    $region7: #{multi_head_attention.3} parent=1 // loop_footer_branch
      %13 = sbr.rel target = $region3
    $region8: #{multi_head_attention.3} parent=1 // loop_exit
      _
    %807 = vsyncpa [#allocation6], 1
    %s808 = scalar_lea.sflag [#allocation6], 1
    %809 = vsyncpa %s808, 1
    %810 = vsyncpa [#allocation7], 1
    %s811 = scalar_lea.sflag [#allocation7], 1
    %812 = vsyncpa %s811, 1

</llo_original>
